<compile_context>
chip_gen: v5e
topology: v5e:2x2
jax: 0.10.0
libtpu: 0.0.40
codegen_flags: <defaults>
</compile_context>

<pallas_src>
import functools

import jax
import jax.numpy as jnp
from jax.experimental import pallas as pl
from jax.experimental.pallas import tpu as pltpu

EPS = 1e-5  # torch.nn.LayerNorm default eps


def _round_up(x, m):
    return (x + m - 1) // m * m


def _layernorm(x, g, b):
    mu = jnp.mean(x, axis=-1, keepdims=True)
    var = jnp.mean((x - mu) ** 2, axis=-1, keepdims=True)
    return (x - mu) * jax.lax.rsqrt(var + EPS) * g + b


def _vmem_limit(in_bytes, out_bytes, scratch_bytes=0, headroom=16 << 20):
    """Scoped-VMEM budget: double-buffered in/out blocks + scratch + headroom,
    clamped so it is >= every chip's default and <= v7x's 64 MiB physical."""
    need = 2 * (in_bytes + out_bytes) + scratch_bytes + headroom
    return int(min(max(need, 32 << 20), 56 << 20))


def _pick_batch_block(B, T, max_rows=1024):
    """Largest divisor of B keeping Bb*T rows within a modest VMEM budget."""
    bb = 1
    for cand in range(1, B + 1):
        if B % cand == 0 and cand * T <= max(max_rows, T):
            bb = cand
    return bb


def _pick_kv_tile(T, max_tile=512):
    """K-chunk width for the online-softmax attention loop."""
    if T <= max_tile:
        return T
    for tk in range(max_tile, 0, -1):
        if T % tk == 0:
            return tk
    return T


def _pick_vocab_tile(Vp, max_tile=512):
    """Largest 128-multiple divisor of the padded vocab, capped at max_tile."""
    tv = 128
    for cand in range(128, min(max_tile, Vp) + 1, 128):
        if Vp % cand == 0:
            tv = cand
    return min(tv, Vp)


def gpt_blocks_kernel(n_head, n_layer, kv_tile,
                      x_ref, ln1g_ref, ln1b_ref, wqkv_ref, wproj_ref, bproj_ref,
                      ln2g_ref, ln2b_ref, w1_ref, b1_ref, w2_ref, b2_ref,
                      lnfg_ref, lnfb_ref,
                      out_ref, acc_ref):
    """All transformer blocks (+ hoisted ln_f) for Bb batch rows.

    grid = (B//Bb, n_layer); the residual stream (Bb*T, C) f32 lives in
    acc_ref across the layer ("arbitrary") axis.  Per-layer weights arrive via
    the leading stacked dim of each weight ref (prefetched while computing).
    """
    l = pl.program_id(1)
    Bb, T, C = out_ref.shape
    H = n_head
    hs = C // H
    M = Bb * T

    @pl.when(l == 0)
    def _():
        acc_ref[...] = x_ref[...].reshape(M, C)          # embeddings, f32

    x = acc_ref[...]                                      # (M, C) f32 residual

    # ---- multi-head causal self-attention ----
    h = _layernorm(x, ln1g_ref[0, 0], ln1b_ref[0, 0]).astype(jnp.bfloat16)
    # fused QKV: one wide MXU pass (M, C) @ (C, 3C); single cast to bf16
    qkv = jnp.dot(h, wqkv_ref[0],
                  preferred_element_type=jnp.float32).astype(jnp.bfloat16)
    q = qkv[:, :C] * (hs ** -0.5)          # fold scale into q (stays bf16)
    k = qkv[:, C:2 * C]
    v = qkv[:, 2 * C:]

    def to_heads(t):                       # (M, C) -> (H*Bb, T, hs)
        th = jnp.stack([t[:, i * hs:(i + 1) * hs] for i in range(H)], axis=0)
        return th.reshape(H * Bb, T, hs)

    qh, kh, vh = to_heads(q), to_heads(k), to_heads(v)

    # flash-style online softmax over K chunks (bounds VMEM at large T)
    tk = kv_tile
    nk = T // tk
    row = jax.lax.broadcasted_iota(jnp.int32, (T, tk), 0)
    col0 = jax.lax.broadcasted_iota(jnp.int32, (T, tk), 1)
    m_i = jnp.full((H * Bb, T, 1), -1e30, jnp.float32)
    l_i = jnp.zeros((H * Bb, T, 1), jnp.float32)
    acc = jnp.zeros((H * Bb, T, hs), jnp.float32)
    for c in range(nk):
        kc = kh[:, c * tk:(c + 1) * tk, :]
        vc = vh[:, c * tk:(c + 1) * tk, :]
        s = jnp.einsum('bqd,bkd->bqk', qh, kc,
                       preferred_element_type=jnp.float32)      # (H*Bb, T, tk)
        mask = (col0 + c * tk) <= row                           # causal
        s = jnp.where(mask[None, :, :], s, -1e30)
        m_new = jnp.maximum(m_i, jnp.max(s, axis=-1, keepdims=True))
        alpha = jnp.exp(m_i - m_new)
        p = jnp.exp(s - m_new)
        l_i = alpha * l_i + jnp.sum(p, axis=-1, keepdims=True)
        acc = alpha * acc + jnp.einsum('bqk,bkd->bqd',
                                       p.astype(jnp.bfloat16), vc,
                                       preferred_element_type=jnp.float32)
        m_i = m_new
    oh = acc * pl.reciprocal(l_i, approx=True)                  # (H*Bb, T, hs)

    # merge heads -> (M, C); single full-width (C, C) output projection
    oh3 = oh.reshape(H, M, hs)
    attn = jnp.concatenate([oh3[i] for i in range(H)], axis=-1)
    proj = jnp.dot(attn.astype(jnp.bfloat16), wproj_ref[0],
                   preferred_element_type=jnp.float32) + bproj_ref[0, 0]
    x = x + proj

    # ---- feed-forward: Linear -> ReLU -> Linear ----
    h2 = _layernorm(x, ln2g_ref[0, 0], ln2b_ref[0, 0]).astype(jnp.bfloat16)
    ff = jnp.dot(h2, w1_ref[0], preferred_element_type=jnp.float32) + b1_ref[0, 0]
    ff = jnp.maximum(ff, 0.0).astype(jnp.bfloat16)
    ff = jnp.dot(ff, w2_ref[0], preferred_element_type=jnp.float32) + b2_ref[0, 0]
    x = x + ff

    acc_ref[...] = x

    # hoisted final LayerNorm: write bf16 normalized activations once
    @pl.when(l == n_layer - 1)
    def _():
        y = _layernorm(x, lnfg_ref[0], lnfb_ref[0]).astype(jnp.bfloat16)
        out_ref[...] = y.reshape(Bb, T, C)


def final_head_kernel(x_ref, wh_ref, bh_ref, out_ref):
    """lm_head matmul for one vocab tile over all B*T rows (ln_f already done)."""
    out_ref[...] = (jnp.dot(x_ref[...], wh_ref[...],
                            preferred_element_type=jnp.float32) + bh_ref[...])


def run_blocks(x, p, n_head):
    B, T, C = x.shape
    L = p['wqkv'].shape[0]
    Bb = _pick_batch_block(B, T)
    kv_tile = _pick_kv_tile(T)

    def wmap(nb, l):
        return (l, 0, 0)

    def cmap(nb, l):
        return (0, 0)

    in_specs = [
        pl.BlockSpec((Bb, T, C), lambda nb, l: (nb, 0, 0)),   # embeddings
        pl.BlockSpec((1, 1, C), wmap),                        # ln1_g
        pl.BlockSpec((1, 1, C), wmap),                        # ln1_b
        pl.BlockSpec((1, C, 3 * C), wmap),                    # wqkv
        pl.BlockSpec((1, C, C), wmap),                        # wproj
        pl.BlockSpec((1, 1, C), wmap),                        # bproj
        pl.BlockSpec((1, 1, C), wmap),                        # ln2_g
        pl.BlockSpec((1, 1, C), wmap),                        # ln2_b
        pl.BlockSpec((1, C, 4 * C), wmap),                    # w1
        pl.BlockSpec((1, 1, 4 * C), wmap),                    # b1
        pl.BlockSpec((1, 4 * C, C), wmap),                    # w2
        pl.BlockSpec((1, 1, C), wmap),                        # b2
        pl.BlockSpec((1, C), cmap),                           # lnf_g
        pl.BlockSpec((1, C), cmap),                           # lnf_b
    ]

    # block-budget estimate for the explicit scoped-VMEM limit
    in_bytes = (Bb * T * C * 4               # embeddings block (f32)
                + 12 * C * C * 2             # bf16 matmul weights per layer
                + 13 * C * 4)                # LN params / biases (f32)
    out_bytes = Bb * T * C * 2               # bf16 normalized activations
    scratch_bytes = (Bb * T * C * 4
                     + 3 * (n_head * Bb) * T * kv_tile * 4)   # attention temps

    return pl.pallas_call(
        functools.partial(gpt_blocks_kernel, n_head, L, kv_tile),
        out_shape=jax.ShapeDtypeStruct((B, T, C), jnp.bfloat16),
        grid=(B // Bb, L),
        in_specs=in_specs,
        out_specs=pl.BlockSpec((Bb, T, C), lambda nb, l: (nb, 0, 0)),
        scratch_shapes=[pltpu.VMEM((Bb * T, C), jnp.float32)],   # resident residual
        compiler_params=pltpu.CompilerParams(
            dimension_semantics=("parallel", "arbitrary"),
            vmem_limit_bytes=_vmem_limit(in_bytes, out_bytes, scratch_bytes)),
    )(x, p['ln1_g'], p['ln1_b'], p['wqkv'], p['wproj'], p['bproj'],
      p['ln2_g'], p['ln2_b'], p['w1'], p['b1'], p['w2'], p['b2'],
      p['lnf_g'], p['lnf_b'])


def run_final(x_flat, w_head, b_head, tile_v=512):
    """lm_head over flattened (B*T, C) bf16 activations; w_head streams once."""
    M, C = x_flat.shape
    Vp = w_head.shape[1]
    tv = _pick_vocab_tile(Vp, tile_v)

    in_bytes = M * C * 2 + C * tv * 2 + tv * 4
    out_bytes = M * tv * 4

    return pl.pallas_call(
        final_head_kernel,
        out_shape=jax.ShapeDtypeStruct((M, Vp), jnp.float32),
        grid=(Vp // tv,),
        in_specs=[
            pl.BlockSpec((M, C), lambda j: (0, 0)),    # activations resident
            pl.BlockSpec((C, tv), lambda j: (0, j)),   # w_head: each tile streamed once
            pl.BlockSpec((1, tv), lambda j: (0, j)),
        ],
        out_specs=pl.BlockSpec((M, tv), lambda j: (0, j)),
        compiler_params=pltpu.CompilerParams(
            dimension_semantics=("parallel",),
            vmem_limit_bytes=_vmem_limit(in_bytes, out_bytes)),
    )(x_flat, w_head, b_head)


def init_params(key, vocab_size, block_size, n_embd, n_layer):
    C, L = n_embd, n_layer
    Vp = _round_up(vocab_size, 128)

    def nrm(k, shape):
        return jax.random.normal(k, shape, jnp.float32) * 0.02

    keys = jax.random.split(key, 7)
    w_head = jnp.zeros((C, Vp), jnp.float32).at[:, :vocab_size].set(
        nrm(keys[6], (C, vocab_size)))
    return {
        'tok_emb': nrm(keys[0], (vocab_size, C)),
        'pos_emb': nrm(keys[1], (block_size, C)),
        # per-layer params stacked along a leading layer dim
        'ln1_g': jnp.ones((L, 1, C), jnp.float32),
        'ln1_b': jnp.zeros((L, 1, C), jnp.float32),
        'wqkv': nrm(keys[2], (L, C, 3 * C)).astype(jnp.bfloat16),
        'wproj': nrm(keys[3], (L, C, C)).astype(jnp.bfloat16),
        'bproj': jnp.zeros((L, 1, C), jnp.float32),
        'ln2_g': jnp.ones((L, 1, C), jnp.float32),
        'ln2_b': jnp.zeros((L, 1, C), jnp.float32),
        'w1': nrm(keys[4], (L, C, 4 * C)).astype(jnp.bfloat16),
        'b1': jnp.zeros((L, 1, 4 * C), jnp.float32),
        'w2': nrm(keys[5], (L, 4 * C, C)).astype(jnp.bfloat16),
        'b2': jnp.zeros((L, 1, C), jnp.float32),
        'lnf_g': jnp.ones((1, C), jnp.float32),
        'lnf_b': jnp.zeros((1, C), jnp.float32),
        'w_head': w_head.astype(jnp.bfloat16),     # padded to (C, Vp)
        'b_head': jnp.zeros((1, Vp), jnp.float32),
    }


def gpt_forward(params, idx, n_head, vocab_size):
    """GPTLanguageModel.forward(idx, targets=None) -> logits (loss=None)."""
    B, T = idx.shape
    C = params['tok_emb'].shape[1]
    tok_emb = jnp.take(params['tok_emb'], idx, axis=0)      # (B, T, C) gather (glue)
    pos_emb = params['pos_emb'][:T][None, :, :]             # (1, T, C)
    x = (tok_emb + pos_emb).astype(jnp.float32)
    y = run_blocks(x, params, n_head)                       # (B, T, C) bf16, ln_f applied
    logits_p = run_final(y.reshape(B * T, C),
                         params['w_head'], params['b_head'])
    Vp = logits_p.shape[-1]
    return logits_p.reshape(B, T, Vp)[:, :, :vocab_size]    # drop vocab padding


if __name__ == "__main__":
    vocab_size, block_size, n_embd, n_head, n_layer, dropout = 65, 8, 32, 4, 2, 0.0
    B, T = 2, 8

    key = jax.random.PRNGKey(0)
    pkey, ikey = jax.random.split(key)
    params = init_params(pkey, vocab_size, block_size, n_embd, n_layer)
    idx = jax.random.randint(ikey, (B, T), 0, vocab_size, dtype=jnp.int32)

    logits = gpt_forward(params, idx, n_head, vocab_size)
    jax.block_until_ready(logits)
    assert logits.shape == (B, T, vocab_size)
    assert bool(jnp.all(jnp.isfinite(logits)))
    print("KERNEL_OK")
</pallas_src>

<mosaic_0001>
module attributes {stable_mosaic.version = 11 : i64} {
  func.func @gpt_blocks_kernel(%arg0: i32, %arg1: i32, %arg2: memref<2x8x32xf32, #tpu.memory_space<vmem>>, %arg3: memref<1x1x32xf32, #tpu.memory_space<vmem>>, %arg4: memref<1x1x32xf32, #tpu.memory_space<vmem>>, %arg5: memref<1x32x96xbf16, #tpu.memory_space<vmem>>, %arg6: memref<1x32x32xbf16, #tpu.memory_space<vmem>>, %arg7: memref<1x1x32xf32, #tpu.memory_space<vmem>>, %arg8: memref<1x1x32xf32, #tpu.memory_space<vmem>>, %arg9: memref<1x1x32xf32, #tpu.memory_space<vmem>>, %arg10: memref<1x32x128xbf16, #tpu.memory_space<vmem>>, %arg11: memref<1x1x128xf32, #tpu.memory_space<vmem>>, %arg12: memref<1x128x32xbf16, #tpu.memory_space<vmem>>, %arg13: memref<1x1x32xf32, #tpu.memory_space<vmem>>, %arg14: memref<1x32xf32, #tpu.memory_space<vmem>>, %arg15: memref<1x32xf32, #tpu.memory_space<vmem>>, %arg16: memref<2x8x32xbf16, #tpu.memory_space<vmem>>, %arg17: memref<16x32xf32, #tpu.memory_space<vmem>>) attributes {dimension_semantics = [#tpu.dimension_semantics<parallel>, #tpu.dimension_semantics<arbitrary>], iteration_bounds = array<i64: 1, 2>, scalar_prefetch = 0 : i64, scratch_operands = 1 : i64, tpu.core_type = #tpu.core_type<tc>, window_params = [{transform_indices = @transform_0, window_bounds = array<i64: 2, 8, 32>}, {transform_indices = @transform_1, window_bounds = array<i64: 1, 1, 32>}, {transform_indices = @transform_2, window_bounds = array<i64: 1, 1, 32>}, {transform_indices = @transform_3, window_bounds = array<i64: 1, 32, 96>}, {transform_indices = @transform_4, window_bounds = array<i64: 1, 32, 32>}, {transform_indices = @transform_5, window_bounds = array<i64: 1, 1, 32>}, {transform_indices = @transform_6, window_bounds = array<i64: 1, 1, 32>}, {transform_indices = @transform_7, window_bounds = array<i64: 1, 1, 32>}, {transform_indices = @transform_8, window_bounds = array<i64: 1, 32, 128>}, {transform_indices = @transform_9, window_bounds = array<i64: 1, 1, 128>}, {transform_indices = @transform_10, window_bounds = array<i64: 1, 128, 32>}, {transform_indices = @transform_11, window_bounds = array<i64: 1, 1, 32>}, {pipeline_mode = #tpu.pipeline_mode<synchronous>, transform_indices = @transform_12, window_bounds = array<i64: 1, 32>}, {pipeline_mode = #tpu.pipeline_mode<synchronous>, transform_indices = @transform_13, window_bounds = array<i64: 1, 32>}, {transform_indices = @transform_14, window_bounds = array<i64: 2, 8, 32>}]} {
    %c0_i32 = arith.constant 0 : i32
    %0 = arith.cmpi eq, %arg1, %c0_i32 : i32
    %1 = arith.extui %0 : i1 to i32
    %c0_i32_0 = arith.constant 0 : i32
    %2 = arith.cmpi ne, %1, %c0_i32_0 : i32
    scf.if %2 {
      %c0_62 = arith.constant 0 : index
      %c0_63 = arith.constant 0 : index
      %c0_64 = arith.constant 0 : index
      %179 = vector.load %arg2[%c0_62, %c0_63, %c0_64] : memref<2x8x32xf32, #tpu.memory_space<vmem>>, vector<2x8x32xf32>
      %180 = vector.shape_cast %179 : vector<2x8x32xf32> to vector<16x32xf32>
      %c0_65 = arith.constant 0 : index
      %c0_66 = arith.constant 0 : index
      %181 = vector.load %arg17[%c0_65, %c0_66] : memref<16x32xf32, #tpu.memory_space<vmem>>, vector<16x32xf32>
      tpu.vector_store %arg17[%c0_65, %c0_66], %180 {strides = array<i32>} : memref<16x32xf32, #tpu.memory_space<vmem>>, vector<16x32xf32>,
    } else {
    }
    %c0 = arith.constant 0 : index
    %c0_1 = arith.constant 0 : index
    %3 = vector.load %arg17[%c0, %c0_1] : memref<16x32xf32, #tpu.memory_space<vmem>>, vector<16x32xf32>
    %c0_2 = arith.constant 0 : index
    %c0_3 = arith.constant 0 : index
    %c0_4 = arith.constant 0 : index
    %4 = vector.load %arg3[%c0_2, %c0_3, %c0_4] : memref<1x1x32xf32, #tpu.memory_space<vmem>>, vector<1x1x32xf32>
    %5 = vector.shape_cast %4 : vector<1x1x32xf32> to vector<32xf32>
    %c0_5 = arith.constant 0 : index
    %c0_6 = arith.constant 0 : index
    %c0_7 = arith.constant 0 : index
    %6 = vector.load %arg4[%c0_5, %c0_6, %c0_7] : memref<1x1x32xf32, #tpu.memory_space<vmem>>, vector<1x1x32xf32>
    %7 = vector.shape_cast %6 : vector<1x1x32xf32> to vector<32xf32>
    %cst = arith.constant dense<0.000000e+00> : vector<16xf32>
    %8 = vector.multi_reduction <add>, %3, %cst [1] : vector<16x32xf32> to vector<16xf32>
    %9 = vector.shape_cast %8 : vector<16xf32> to vector<16x1xf32>
    %cst_8 = arith.constant 3.200000e+01 : f32
    %10 = vector.broadcast %cst_8 : f32 to vector<16x1xf32>
    %11 = arith.divf %9, %10 : vector<16x1xf32>
    %12 = vector.broadcast %11 : vector<16x1xf32> to vector<16x32xf32>
    %13 = arith.subf %3, %12 : vector<16x32xf32>
    %14 = arith.mulf %13, %13 : vector<16x32xf32>
    %cst_9 = arith.constant dense<0.000000e+00> : vector<16xf32>
    %15 = vector.multi_reduction <add>, %14, %cst_9 [1] : vector<16x32xf32> to vector<16xf32>
    %16 = vector.shape_cast %15 : vector<16xf32> to vector<16x1xf32>
    %cst_10 = arith.constant 3.200000e+01 : f32
    %17 = vector.broadcast %cst_10 : f32 to vector<16x1xf32>
    %18 = arith.divf %16, %17 : vector<16x1xf32>
    %19 = vector.broadcast %11 : vector<16x1xf32> to vector<16x32xf32>
    %20 = arith.subf %3, %19 : vector<16x32xf32>
    %cst_11 = arith.constant 9.99999974E-6 : f32
    %21 = vector.broadcast %cst_11 : f32 to vector<16x1xf32>
    %22 = arith.addf %18, %21 : vector<16x1xf32>
    %23 = math.rsqrt %22 : vector<16x1xf32>
    %24 = vector.broadcast %23 : vector<16x1xf32> to vector<16x32xf32>
    %25 = arith.mulf %20, %24 : vector<16x32xf32>
    %26 = vector.shape_cast %5 : vector<32xf32> to vector<1x32xf32>
    %27 = vector.broadcast %26 : vector<1x32xf32> to vector<16x32xf32>
    %28 = arith.mulf %25, %27 : vector<16x32xf32>
    %29 = vector.shape_cast %7 : vector<32xf32> to vector<1x32xf32>
    %30 = vector.broadcast %29 : vector<1x32xf32> to vector<16x32xf32>
    %31 = arith.addf %28, %30 : vector<16x32xf32>
    %32 = arith.truncf %31 : vector<16x32xf32> to vector<16x32xbf16>
    %c0_12 = arith.constant 0 : index
    %c0_13 = arith.constant 0 : index
    %c0_14 = arith.constant 0 : index
    %33 = vector.load %arg5[%c0_12, %c0_13, %c0_14] : memref<1x32x96xbf16, #tpu.memory_space<vmem>>, vector<1x32x96xbf16>
    %34 = vector.shape_cast %33 : vector<1x32x96xbf16> to vector<32x96xbf16>
    %cst_15 = arith.constant dense<0.000000e+00> : vector<16x96xf32>
    %35 = tpu.matmul %32, %34, %cst_15 {dimension_numbers = #tpu.dot_dimension_numbers<[1], [0], [0], [1], [0, 0, 1, 1], [], []>} : vector<16x32xbf16>, vector<32x96xbf16>, vector<16x96xf32> -> vector<16x96xf32>
    %36 = arith.truncf %35 : vector<16x96xf32> to vector<16x96xbf16>
    %37 = vector.extract_strided_slice %36 {offsets = [0, 0], sizes = [16, 32], strides = [1, 1]} : vector<16x96xbf16> to vector<16x32xbf16>
    %cst_16 = arith.constant 3.535160e-01 : bf16
    %38 = vector.broadcast %cst_16 : bf16 to vector<16x32xbf16>
    %39 = arith.mulf %37, %38 : vector<16x32xbf16>
    %40 = vector.extract_strided_slice %36 {offsets = [0, 32], sizes = [16, 32], strides = [1, 1]} : vector<16x96xbf16> to vector<16x32xbf16>
    %41 = vector.extract_strided_slice %36 {offsets = [0, 64], sizes = [16, 32], strides = [1, 1]} : vector<16x96xbf16> to vector<16x32xbf16>
    %42 = vector.extract_strided_slice %39 {offsets = [0, 0], sizes = [16, 8], strides = [1, 1]} : vector<16x32xbf16> to vector<16x8xbf16>
    %43 = vector.extract_strided_slice %39 {offsets = [0, 8], sizes = [16, 8], strides = [1, 1]} : vector<16x32xbf16> to vector<16x8xbf16>
    %44 = vector.extract_strided_slice %39 {offsets = [0, 16], sizes = [16, 8], strides = [1, 1]} : vector<16x32xbf16> to vector<16x8xbf16>
    %45 = vector.extract_strided_slice %39 {offsets = [0, 24], sizes = [16, 8], strides = [1, 1]} : vector<16x32xbf16> to vector<16x8xbf16>
    %46 = vector.shape_cast %42 : vector<16x8xbf16> to vector<1x16x8xbf16>
    %47 = vector.shape_cast %43 : vector<16x8xbf16> to vector<1x16x8xbf16>
    %48 = vector.shape_cast %44 : vector<16x8xbf16> to vector<1x16x8xbf16>
    %49 = vector.shape_cast %45 : vector<16x8xbf16> to vector<1x16x8xbf16>
    %50 = tpu.concatenate %46, %47, %48, %49 in 0 : vector<1x16x8xbf16>, vector<1x16x8xbf16>, vector<1x16x8xbf16>, vector<1x16x8xbf16> -> vector<4x16x8xbf16>
    %51 = vector.shape_cast %50 : vector<4x16x8xbf16> to vector<8x8x8xbf16>
    %52 = vector.extract_strided_slice %40 {offsets = [0, 0], sizes = [16, 8], strides = [1, 1]} : vector<16x32xbf16> to vector<16x8xbf16>
    %53 = vector.extract_strided_slice %40 {offsets = [0, 8], sizes = [16, 8], strides = [1, 1]} : vector<16x32xbf16> to vector<16x8xbf16>
    %54 = vector.extract_strided_slice %40 {offsets = [0, 16], sizes = [16, 8], strides = [1, 1]} : vector<16x32xbf16> to vector<16x8xbf16>
    %55 = vector.extract_strided_slice %40 {offsets = [0, 24], sizes = [16, 8], strides = [1, 1]} : vector<16x32xbf16> to vector<16x8xbf16>
    %56 = vector.shape_cast %52 : vector<16x8xbf16> to vector<1x16x8xbf16>
    %57 = vector.shape_cast %53 : vector<16x8xbf16> to vector<1x16x8xbf16>
    %58 = vector.shape_cast %54 : vector<16x8xbf16> to vector<1x16x8xbf16>
    %59 = vector.shape_cast %55 : vector<16x8xbf16> to vector<1x16x8xbf16>
    %60 = tpu.concatenate %56, %57, %58, %59 in 0 : vector<1x16x8xbf16>, vector<1x16x8xbf16>, vector<1x16x8xbf16>, vector<1x16x8xbf16> -> vector<4x16x8xbf16>
    %61 = vector.shape_cast %60 : vector<4x16x8xbf16> to vector<8x8x8xbf16>
    %62 = vector.extract_strided_slice %41 {offsets = [0, 0], sizes = [16, 8], strides = [1, 1]} : vector<16x32xbf16> to vector<16x8xbf16>
    %63 = vector.extract_strided_slice %41 {offsets = [0, 8], sizes = [16, 8], strides = [1, 1]} : vector<16x32xbf16> to vector<16x8xbf16>
    %64 = vector.extract_strided_slice %41 {offsets = [0, 16], sizes = [16, 8], strides = [1, 1]} : vector<16x32xbf16> to vector<16x8xbf16>
    %65 = vector.extract_strided_slice %41 {offsets = [0, 24], sizes = [16, 8], strides = [1, 1]} : vector<16x32xbf16> to vector<16x8xbf16>
    %66 = vector.shape_cast %62 : vector<16x8xbf16> to vector<1x16x8xbf16>
    %67 = vector.shape_cast %63 : vector<16x8xbf16> to vector<1x16x8xbf16>
    %68 = vector.shape_cast %64 : vector<16x8xbf16> to vector<1x16x8xbf16>
    %69 = vector.shape_cast %65 : vector<16x8xbf16> to vector<1x16x8xbf16>
    %70 = tpu.concatenate %66, %67, %68, %69 in 0 : vector<1x16x8xbf16>, vector<1x16x8xbf16>, vector<1x16x8xbf16>, vector<1x16x8xbf16> -> vector<4x16x8xbf16>
    %71 = vector.shape_cast %70 : vector<4x16x8xbf16> to vector<8x8x8xbf16>
    %72 = tpu.iota {dimensions = array<i32: 0>} : vector<8x8xi32>
    %73 = tpu.iota {dimensions = array<i32: 1>} : vector<8x8xi32>
    %cst_17 = arith.constant -1.000000e+30 : f32
    %74 = vector.broadcast %cst_17 : f32 to vector<8x8x1xf32>
    %cst_18 = arith.constant 0.000000e+00 : f32
    %75 = vector.broadcast %cst_18 : f32 to vector<8x8x1xf32>
    %cst_19 = arith.constant 0.000000e+00 : f32
    %76 = vector.broadcast %cst_19 : f32 to vector<8x8x8xf32>
    "tpu.trace_start"() <{level = 10 : i32, message = "bqd,bkd->bqk"}> : () -> ()
    %cst_20 = arith.constant dense<0.000000e+00> : vector<8x8x8xf32>
    %77 = tpu.matmul %51, %61, %cst_20 {dimension_numbers = #tpu.dot_dimension_numbers<[2], [2], [1], [1], [0, 0, 0, 1, 1, 1], [0], [0]>} : vector<8x8x8xbf16>, vector<8x8x8xbf16>, vector<8x8x8xf32> -> vector<8x8x8xf32>
    "tpu.trace_stop"() : () -> ()
    %c0_i32_21 = arith.constant 0 : i32
    %78 = vector.broadcast %c0_i32_21 : i32 to vector<8x8xi32>
    %79 = arith.addi %73, %78 : vector<8x8xi32>
    %80 = arith.cmpi sle, %79, %72 : vector<8x8xi32>
    %81 = vector.shape_cast %80 : vector<8x8xi1> to vector<1x8x8xi1>
    %cst_22 = arith.constant -1.000000e+30 : f32
    %82 = vector.shape_cast %81 : vector<1x8x8xi1> to vector<1x8x8xi1>
    %83 = vector.broadcast %82 : vector<1x8x8xi1> to vector<8x8x8xi1>
    %84 = vector.broadcast %cst_22 : f32 to vector<8x8x8xf32>
    %85 = arith.select %83, %77, %84 : vector<8x8x8xi1>, vector<8x8x8xf32>
    %cst_23 = arith.constant dense<0xFF800000> : vector<8x8xf32>
    %86 = vector.multi_reduction <maximumf>, %85, %cst_23 [2] : vector<8x8x8xf32> to vector<8x8xf32>
    %87 = vector.shape_cast %86 : vector<8x8xf32> to vector<8x8x1xf32>
    %88 = arith.maximumf %74, %87 : vector<8x8x1xf32>
    %89 = arith.subf %74, %88 : vector<8x8x1xf32>
    %90 = math.exp %89 : vector<8x8x1xf32>
    %91 = vector.broadcast %88 : vector<8x8x1xf32> to vector<8x8x8xf32>
    %92 = arith.subf %85, %91 : vector<8x8x8xf32>
    %93 = math.exp %92 : vector<8x8x8xf32>
    %94 = arith.mulf %90, %75 : vector<8x8x1xf32>
    %cst_24 = arith.constant dense<0.000000e+00> : vector<8x8xf32>
    %95 = vector.multi_reduction <add>, %93, %cst_24 [2] : vector<8x8x8xf32> to vector<8x8xf32>
    %96 = vector.shape_cast %95 : vector<8x8xf32> to vector<8x8x1xf32>
    %97 = arith.addf %94, %96 : vector<8x8x1xf32>
    %98 = vector.broadcast %90 : vector<8x8x1xf32> to vector<8x8x8xf32>
    %99 = arith.mulf %98, %76 : vector<8x8x8xf32>
    %100 = arith.truncf %93 : vector<8x8x8xf32> to vector<8x8x8xbf16>
    "tpu.trace_start"() <{level = 10 : i32, message = "bqk,bkd->bqd"}> : () -> ()
    %cst_25 = arith.constant dense<0.000000e+00> : vector<8x8x8xf32>
    %101 = tpu.matmul %100, %71, %cst_25 {dimension_numbers = #tpu.dot_dimension_numbers<[2], [1], [1], [2], [0, 0, 0, 1, 1, 2], [0], [0]>} : vector<8x8x8xbf16>, vector<8x8x8xbf16>, vector<8x8x8xf32> -> vector<8x8x8xf32>
    "tpu.trace_stop"() : () -> ()
    %102 = arith.addf %99, %101 : vector<8x8x8xf32>
    %103 = tpu.reciprocal %97 {approx = true} : vector<8x8x1xf32> -> vector<8x8x1xf32>
    %104 = vector.broadcast %103 : vector<8x8x1xf32> to vector<8x8x8xf32>
    %105 = arith.mulf %102, %104 : vector<8x8x8xf32>
    %106 = vector.shape_cast %105 : vector<8x8x8xf32> to vector<4x16x8xf32>
    %107 = vector.extract_strided_slice %106 {offsets = [0, 0, 0], sizes = [1, 16, 8], strides = [1, 1, 1]} : vector<4x16x8xf32> to vector<1x16x8xf32>
    %108 = vector.shape_cast %107 : vector<1x16x8xf32> to vector<16x8xf32>
    %109 = vector.extract_strided_slice %106 {offsets = [1, 0, 0], sizes = [1, 16, 8], strides = [1, 1, 1]} : vector<4x16x8xf32> to vector<1x16x8xf32>
    %110 = vector.shape_cast %109 : vector<1x16x8xf32> to vector<16x8xf32>
    %111 = vector.extract_strided_slice %106 {offsets = [2, 0, 0], sizes = [1, 16, 8], strides = [1, 1, 1]} : vector<4x16x8xf32> to vector<1x16x8xf32>
    %112 = vector.shape_cast %111 : vector<1x16x8xf32> to vector<16x8xf32>
    %113 = vector.extract_strided_slice %106 {offsets = [3, 0, 0], sizes = [1, 16, 8], strides = [1, 1, 1]} : vector<4x16x8xf32> to vector<1x16x8xf32>
    %114 = vector.shape_cast %113 : vector<1x16x8xf32> to vector<16x8xf32>
    %115 = tpu.concatenate %108, %110, %112, %114 in 1 : vector<16x8xf32>, vector<16x8xf32>, vector<16x8xf32>, vector<16x8xf32> -> vector<16x32xf32>
    %116 = arith.truncf %115 : vector<16x32xf32> to vector<16x32xbf16>
    %c0_26 = arith.constant 0 : index
    %c0_27 = arith.constant 0 : index
    %c0_28 = arith.constant 0 : index
    %117 = vector.load %arg6[%c0_26, %c0_27, %c0_28] : memref<1x32x32xbf16, #tpu.memory_space<vmem>>, vector<1x32x32xbf16>
    %118 = vector.shape_cast %117 : vector<1x32x32xbf16> to vector<32x32xbf16>
    %cst_29 = arith.constant dense<0.000000e+00> : vector<16x32xf32>
    %119 = tpu.matmul %116, %118, %cst_29 {dimension_numbers = #tpu.dot_dimension_numbers<[1], [0], [0], [1], [0, 0, 1, 1], [], []>} : vector<16x32xbf16>, vector<32x32xbf16>, vector<16x32xf32> -> vector<16x32xf32>
    %c0_30 = arith.constant 0 : index
    %c0_31 = arith.constant 0 : index
    %c0_32 = arith.constant 0 : index
    %120 = vector.load %arg7[%c0_30, %c0_31, %c0_32] : memref<1x1x32xf32, #tpu.memory_space<vmem>>, vector<1x1x32xf32>
    %121 = vector.shape_cast %120 : vector<1x1x32xf32> to vector<32xf32>
    %122 = vector.shape_cast %121 : vector<32xf32> to vector<1x32xf32>
    %123 = vector.broadcast %122 : vector<1x32xf32> to vector<16x32xf32>
    %124 = arith.addf %119, %123 : vector<16x32xf32>
    %125 = arith.addf %3, %124 : vector<16x32xf32>
    %c0_33 = arith.constant 0 : index
    %c0_34 = arith.constant 0 : index
    %c0_35 = arith.constant 0 : index
    %126 = vector.load %arg8[%c0_33, %c0_34, %c0_35] : memref<1x1x32xf32, #tpu.memory_space<vmem>>, vector<1x1x32xf32>
    %127 = vector.shape_cast %126 : vector<1x1x32xf32> to vector<32xf32>
    %c0_36 = arith.constant 0 : index
    %c0_37 = arith.constant 0 : index
    %c0_38 = arith.constant 0 : index
    %128 = vector.load %arg9[%c0_36, %c0_37, %c0_38] : memref<1x1x32xf32, #tpu.memory_space<vmem>>, vector<1x1x32xf32>
    %129 = vector.shape_cast %128 : vector<1x1x32xf32> to vector<32xf32>
    %cst_39 = arith.constant dense<0.000000e+00> : vector<16xf32>
    %130 = vector.multi_reduction <add>, %125, %cst_39 [1] : vector<16x32xf32> to vector<16xf32>
    %131 = vector.shape_cast %130 : vector<16xf32> to vector<16x1xf32>
    %cst_40 = arith.constant 3.200000e+01 : f32
    %132 = vector.broadcast %cst_40 : f32 to vector<16x1xf32>
    %133 = arith.divf %131, %132 : vector<16x1xf32>
    %134 = vector.broadcast %133 : vector<16x1xf32> to vector<16x32xf32>
    %135 = arith.subf %125, %134 : vector<16x32xf32>
    %136 = arith.mulf %135, %135 : vector<16x32xf32>
    %cst_41 = arith.constant dense<0.000000e+00> : vector<16xf32>
    %137 = vector.multi_reduction <add>, %136, %cst_41 [1] : vector<16x32xf32> to vector<16xf32>
    %138 = vector.shape_cast %137 : vector<16xf32> to vector<16x1xf32>
    %cst_42 = arith.constant 3.200000e+01 : f32
    %139 = vector.broadcast %cst_42 : f32 to vector<16x1xf32>
    %140 = arith.divf %138, %139 : vector<16x1xf32>
    %141 = vector.broadcast %133 : vector<16x1xf32> to vector<16x32xf32>
    %142 = arith.subf %125, %141 : vector<16x32xf32>
    %cst_43 = arith.constant 9.99999974E-6 : f32
    %143 = vector.broadcast %cst_43 : f32 to vector<16x1xf32>
    %144 = arith.addf %140, %143 : vector<16x1xf32>
    %145 = math.rsqrt %144 : vector<16x1xf32>
    %146 = vector.broadcast %145 : vector<16x1xf32> to vector<16x32xf32>
    %147 = arith.mulf %142, %146 : vector<16x32xf32>
    %148 = vector.shape_cast %127 : vector<32xf32> to vector<1x32xf32>
    %149 = vector.broadcast %148 : vector<1x32xf32> to vector<16x32xf32>
    %150 = arith.mulf %147, %149 : vector<16x32xf32>
    %151 = vector.shape_cast %129 : vector<32xf32> to vector<1x32xf32>
    %152 = vector.broadcast %151 : vector<1x32xf32> to vector<16x32xf32>
    %153 = arith.addf %150, %152 : vector<16x32xf32>
    %154 = arith.truncf %153 : vector<16x32xf32> to vector<16x32xbf16>
    %c0_44 = arith.constant 0 : index
    %c0_45 = arith.constant 0 : index
    %c0_46 = arith.constant 0 : index
    %155 = vector.load %arg10[%c0_44, %c0_45, %c0_46] : memref<1x32x128xbf16, #tpu.memory_space<vmem>>, vector<1x32x128xbf16>
    %156 = vector.shape_cast %155 : vector<1x32x128xbf16> to vector<32x128xbf16>
    %cst_47 = arith.constant dense<0.000000e+00> : vector<16x128xf32>
    %157 = tpu.matmul %154, %156, %cst_47 {dimension_numbers = #tpu.dot_dimension_numbers<[1], [0], [0], [1], [0, 0, 1, 1], [], []>} : vector<16x32xbf16>, vector<32x128xbf16>, vector<16x128xf32> -> vector<16x128xf32>
    %c0_48 = arith.constant 0 : index
    %c0_49 = arith.constant 0 : index
    %c0_50 = arith.constant 0 : index
    %158 = vector.load %arg11[%c0_48, %c0_49, %c0_50] : memref<1x1x128xf32, #tpu.memory_space<vmem>>, vector<1x1x128xf32>
    %159 = vector.shape_cast %158 : vector<1x1x128xf32> to vector<128xf32>
    %160 = vector.shape_cast %159 : vector<128xf32> to vector<1x128xf32>
    %161 = vector.broadcast %160 : vector<1x128xf32> to vector<16x128xf32>
    %162 = arith.addf %157, %161 : vector<16x128xf32>
    %cst_51 = arith.constant 0.000000e+00 : f32
    %163 = vector.broadcast %cst_51 : f32 to vector<16x128xf32>
    %164 = arith.maximumf %162, %163 : vector<16x128xf32>
    %165 = arith.truncf %164 : vector<16x128xf32> to vector<16x128xbf16>
    %c0_52 = arith.constant 0 : index
    %c0_53 = arith.constant 0 : index
    %c0_54 = arith.constant 0 : index
    %166 = vector.load %arg12[%c0_52, %c0_53, %c0_54] : memref<1x128x32xbf16, #tpu.memory_space<vmem>>, vector<1x128x32xbf16>
    %167 = vector.shape_cast %166 : vector<1x128x32xbf16> to vector<128x32xbf16>
    %cst_55 = arith.constant dense<0.000000e+00> : vector<16x32xf32>
    %168 = tpu.matmul %165, %167, %cst_55 {dimension_numbers = #tpu.dot_dimension_numbers<[1], [0], [0], [1], [0, 0, 1, 1], [], []>} : vector<16x128xbf16>, vector<128x32xbf16>, vector<16x32xf32> -> vector<16x32xf32>
    %c0_56 = arith.constant 0 : index
    %c0_57 = arith.constant 0 : index
    %c0_58 = arith.constant 0 : index
    %169 = vector.load %arg13[%c0_56, %c0_57, %c0_58] : memref<1x1x32xf32, #tpu.memory_space<vmem>>, vector<1x1x32xf32>
    %170 = vector.shape_cast %169 : vector<1x1x32xf32> to vector<32xf32>
    %171 = vector.shape_cast %170 : vector<32xf32> to vector<1x32xf32>
    %172 = vector.broadcast %171 : vector<1x32xf32> to vector<16x32xf32>
    %173 = arith.addf %168, %172 : vector<16x32xf32>
    %174 = arith.addf %125, %173 : vector<16x32xf32>
    %c0_59 = arith.constant 0 : index
    %c0_60 = arith.constant 0 : index
    %175 = vector.load %arg17[%c0_59, %c0_60] : memref<16x32xf32, #tpu.memory_space<vmem>>, vector<16x32xf32>
    tpu.vector_store %arg17[%c0_59, %c0_60], %174 {strides = array<i32>} : memref<16x32xf32, #tpu.memory_space<vmem>>, vector<16x32xf32>,
    %c1_i32 = arith.constant 1 : i32
    %176 = arith.cmpi eq, %arg1, %c1_i32 : i32
    %177 = arith.extui %176 : i1 to i32
    %c0_i32_61 = arith.constant 0 : i32
    %178 = arith.cmpi ne, %177, %c0_i32_61 : i32
    scf.if %178 {
      %c0_62 = arith.constant 0 : index
      %c0_63 = arith.constant 0 : index
      %179 = vector.load %arg14[%c0_62, %c0_63] : memref<1x32xf32, #tpu.memory_space<vmem>>, vector<1x32xf32>
      %180 = vector.shape_cast %179 : vector<1x32xf32> to vector<32xf32>
      %c0_64 = arith.constant 0 : index
      %c0_65 = arith.constant 0 : index
      %181 = vector.load %arg15[%c0_64, %c0_65] : memref<1x32xf32, #tpu.memory_space<vmem>>, vector<1x32xf32>
      %182 = vector.shape_cast %181 : vector<1x32xf32> to vector<32xf32>
      %cst_66 = arith.constant dense<0.000000e+00> : vector<16xf32>
      %183 = vector.multi_reduction <add>, %174, %cst_66 [1] : vector<16x32xf32> to vector<16xf32>
      %184 = vector.shape_cast %183 : vector<16xf32> to vector<16x1xf32>
      %cst_67 = arith.constant 3.200000e+01 : f32
      %185 = vector.broadcast %cst_67 : f32 to vector<16x1xf32>
      %186 = arith.divf %184, %185 : vector<16x1xf32>
      %187 = vector.broadcast %186 : vector<16x1xf32> to vector<16x32xf32>
      %188 = arith.subf %174, %187 : vector<16x32xf32>
      %189 = arith.mulf %188, %188 : vector<16x32xf32>
      %cst_68 = arith.constant dense<0.000000e+00> : vector<16xf32>
      %190 = vector.multi_reduction <add>, %189, %cst_68 [1] : vector<16x32xf32> to vector<16xf32>
      %191 = vector.shape_cast %190 : vector<16xf32> to vector<16x1xf32>
      %cst_69 = arith.constant 3.200000e+01 : f32
      %192 = vector.broadcast %cst_69 : f32 to vector<16x1xf32>
      %193 = arith.divf %191, %192 : vector<16x1xf32>
      %194 = vector.broadcast %186 : vector<16x1xf32> to vector<16x32xf32>
      %195 = arith.subf %174, %194 : vector<16x32xf32>
      %cst_70 = arith.constant 9.99999974E-6 : f32
      %196 = vector.broadcast %cst_70 : f32 to vector<16x1xf32>
      %197 = arith.addf %193, %196 : vector<16x1xf32>
      %198 = math.rsqrt %197 : vector<16x1xf32>
      %199 = vector.broadcast %198 : vector<16x1xf32> to vector<16x32xf32>
      %200 = arith.mulf %195, %199 : vector<16x32xf32>
      %201 = vector.shape_cast %180 : vector<32xf32> to vector<1x32xf32>
      %202 = vector.broadcast %201 : vector<1x32xf32> to vector<16x32xf32>
      %203 = arith.mulf %200, %202 : vector<16x32xf32>
      %204 = vector.shape_cast %182 : vector<32xf32> to vector<1x32xf32>
      %205 = vector.broadcast %204 : vector<1x32xf32> to vector<16x32xf32>
      %206 = arith.addf %203, %205 : vector<16x32xf32>
      %207 = arith.truncf %206 : vector<16x32xf32> to vector<16x32xbf16>
      %208 = vector.shape_cast %207 : vector<16x32xbf16> to vector<2x8x32xbf16>
      %c0_71 = arith.constant 0 : index
      %c0_72 = arith.constant 0 : index
      %c0_73 = arith.constant 0 : index
      %209 = vector.load %arg16[%c0_71, %c0_72, %c0_73] : memref<2x8x32xbf16, #tpu.memory_space<vmem>>, vector<2x8x32xbf16>
      tpu.vector_store %arg16[%c0_71, %c0_72, %c0_73], %208 {strides = array<i32>} : memref<2x8x32xbf16, #tpu.memory_space<vmem>>, vector<2x8x32xbf16>,
    } else {
    }
    return
  }
  func.func @transform_0(%arg0: i32, %arg1: i32) -> (i32, i32, i32) {
    %c0_i32 = arith.constant 0 : i32
    %c0_i32_0 = arith.constant 0 : i32
    %c0_i32_1 = arith.constant 0 : i32
    return %arg0, %c0_i32, %c0_i32_0 : i32, i32, i32
  }
  func.func @transform_1(%arg0: i32, %arg1: i32) -> (i32, i32, i32) {
    %c0_i32 = arith.constant 0 : i32
    %c0_i32_0 = arith.constant 0 : i32
    %c0_i32_1 = arith.constant 0 : i32
    return %arg1, %c0_i32, %c0_i32_0 : i32, i32, i32
  }
  func.func @transform_2(%arg0: i32, %arg1: i32) -> (i32, i32, i32) {
    %c0_i32 = arith.constant 0 : i32
    %c0_i32_0 = arith.constant 0 : i32
    %c0_i32_1 = arith.constant 0 : i32
    return %arg1, %c0_i32, %c0_i32_0 : i32, i32, i32
  }
  func.func @transform_3(%arg0: i32, %arg1: i32) -> (i32, i32, i32) {
    %c0_i32 = arith.constant 0 : i32
    %c0_i32_0 = arith.constant 0 : i32
    %c0_i32_1 = arith.constant 0 : i32
    return %arg1, %c0_i32, %c0_i32_0 : i32, i32, i32
  }
  func.func @transform_4(%arg0: i32, %arg1: i32) -> (i32, i32, i32) {
    %c0_i32 = arith.constant 0 : i32
    %c0_i32_0 = arith.constant 0 : i32
    %c0_i32_1 = arith.constant 0 : i32
    return %arg1, %c0_i32, %c0_i32_0 : i32, i32, i32
  }
  func.func @transform_5(%arg0: i32, %arg1: i32) -> (i32, i32, i32) {
    %c0_i32 = arith.constant 0 : i32
    %c0_i32_0 = arith.constant 0 : i32
    %c0_i32_1 = arith.constant 0 : i32
    return %arg1, %c0_i32, %c0_i32_0 : i32, i32, i32
  }
  func.func @transform_6(%arg0: i32, %arg1: i32) -> (i32, i32, i32) {
    %c0_i32 = arith.constant 0 : i32
    %c0_i32_0 = arith.constant 0 : i32
    %c0_i32_1 = arith.constant 0 : i32
    return %arg1, %c0_i32, %c0_i32_0 : i32, i32, i32
  }
  func.func @transform_7(%arg0: i32, %arg1: i32) -> (i32, i32, i32) {
    %c0_i32 = arith.constant 0 : i32
    %c0_i32_0 = arith.constant 0 : i32
    %c0_i32_1 = arith.constant 0 : i32
    return %arg1, %c0_i32, %c0_i32_0 : i32, i32, i32
  }
  func.func @transform_8(%arg0: i32, %arg1: i32) -> (i32, i32, i32) {
    %c0_i32 = arith.constant 0 : i32
    %c0_i32_0 = arith.constant 0 : i32
    %c0_i32_1 = arith.constant 0 : i32
    return %arg1, %c0_i32, %c0_i32_0 : i32, i32, i32
  }
  func.func @transform_9(%arg0: i32, %arg1: i32) -> (i32, i32, i32) {
    %c0_i32 = arith.constant 0 : i32
    %c0_i32_0 = arith.constant 0 : i32
    %c0_i32_1 = arith.constant 0 : i32
    return %arg1, %c0_i32, %c0_i32_0 : i32, i32, i32
  }
  func.func @transform_10(%arg0: i32, %arg1: i32) -> (i32, i32, i32) {
    %c0_i32 = arith.constant 0 : i32
    %c0_i32_0 = arith.constant 0 : i32
    %c0_i32_1 = arith.constant 0 : i32
    return %arg1, %c0_i32, %c0_i32_0 : i32, i32, i32
  }
  func.func @transform_11(%arg0: i32, %arg1: i32) -> (i32, i32, i32) {
    %c0_i32 = arith.constant 0 : i32
    %c0_i32_0 = arith.constant 0 : i32
    %c0_i32_1 = arith.constant 0 : i32
    return %arg1, %c0_i32, %c0_i32_0 : i32, i32, i32
  }
  func.func @transform_12(%arg0: i32, %arg1: i32) -> (i32, i32) {
    %c0_i32 = arith.constant 0 : i32
    %c0_i32_0 = arith.constant 0 : i32
    %c0_i32_1 = arith.constant 0 : i32
    return %c0_i32, %c0_i32_0 : i32, i32
  }
  func.func @transform_13(%arg0: i32, %arg1: i32) -> (i32, i32) {
    %c0_i32 = arith.constant 0 : i32
    %c0_i32_0 = arith.constant 0 : i32
    %c0_i32_1 = arith.constant 0 : i32
    return %c0_i32, %c0_i32_0 : i32, i32
  }
  func.func @transform_14(%arg0: i32, %arg1: i32) -> (i32, i32, i32) {
    %c0_i32 = arith.constant 0 : i32
    %c0_i32_0 = arith.constant 0 : i32
    %c0_i32_1 = arith.constant 0 : i32
    return %arg0, %c0_i32, %c0_i32_0 : i32, i32, i32
  }
}

</mosaic_0001>

<llo_original>
// kernel: tpu_custom_call.1
$region0: #{tpu_custom_call.1}
  #allocation0 [shape = 'u32[]', space=smem, size = 0x4, offset = 0x4, fixed_abs, tag = 'smem constant byte address 0x4 - core index']
  #allocation1 [shape = 'u32[72,128]{1,0:T(1,128)}', space=vmem, size = 0x9000, scoped, tag = 'internal scratch']
  #allocation2 [shape = 'f32[16,32]{1,0:T(8,128)}', space=vmem, size = 0x2000, scoped, tag = 'scratch operand']
  %s0 = inlined_call_operand.vmem [shape: f32[2,8,32], index: 0, kind: input, shape index: {}]
  %s1 = inlined_call_operand.vmem [shape: f32[2,1,32], index: 1, kind: input, shape index: {}]
  %s2 = inlined_call_operand.vmem [shape: f32[2,1,32], index: 2, kind: input, shape index: {}]
  %s3 = inlined_call_operand.vmem [shape: bf16[2,32,96], index: 3, kind: input, shape index: {}]
  %s4 = inlined_call_operand.vmem [shape: bf16[2,32,32], index: 4, kind: input, shape index: {}]
  %s5 = inlined_call_operand.vmem [shape: f32[2,1,32], index: 5, kind: input, shape index: {}]
  %s6 = inlined_call_operand.vmem [shape: f32[2,1,32], index: 6, kind: input, shape index: {}]
  %s7 = inlined_call_operand.vmem [shape: f32[2,1,32], index: 7, kind: input, shape index: {}]
  %s8 = inlined_call_operand.vmem [shape: bf16[2,32,128], index: 8, kind: input, shape index: {}]
  %s9 = inlined_call_operand.vmem [shape: f32[2,1,128], index: 9, kind: input, shape index: {}]
  %s10 = inlined_call_operand.vmem [shape: bf16[2,128,32], index: 10, kind: input, shape index: {}]
  %s11 = inlined_call_operand.vmem [shape: f32[2,1,32], index: 11, kind: input, shape index: {}]
  %s12 = inlined_call_operand.vmem [shape: f32[1,32], index: 12, kind: input, shape index: {}]
  %s13 = inlined_call_operand.vmem [shape: f32[1,32], index: 13, kind: input, shape index: {}]
  %s14 = inlined_call_operand.hbm [shape: bf16[2,8,32], index: 14, kind: output, shape index: {}]
  %s15 = sld [smem:[#allocation0]]
  $region97: #{tpu_custom_call.1} parent=0
    _
  %s17 = ssub.s32 1, %s15
  %s18 = scalar_select 0, %s17, %s15
  $region1: #{tpu_custom_call.1} parent=0
    #allocation3 [shape = 'u8[4096]{0}', space=vmem, size = 0x1000, scoped, tag = 'output window, operand 0, single buffered']
    #allocation4 [shape = 's32[2]{0}', space=sflag, size = 0x8, scoped, tag = 'scoped memory for tpu_custom_call.1']
    %19 = vsyncpa [#allocation4], 0
    loop: start=0, step=1, limit=4
    $region2: #{tpu_custom_call.1} parent=1 // loop_pre_header
      _
    $region3: #{tpu_custom_call.1} parent=1 // loop_header
      %s21 = sphi 0, %s25
      %p22 = scmp.ge.s32.totalorder %s21, 4
      %s28 = sphi 0, %s40
      %s29 = sphi 0, %s36
      %s30 = sphi 0, %s28
      %s31 = sphi 0, %s29
      %s32 = sphi 0, %s30
      %s33 = sphi 0, %s31
      %s43 = sphi 0, %s45
      %s46 = sphi 0, %s43
      %s47 = sphi 0, %s46
      %s63 = sphi 0, %s47
      %s69 = sphi 0, %s71
      %s72 = sphi 0, %s69
      %s73 = sphi 0, %s72
      %s89 = sphi 0, %s73
      %s95 = sphi 0, %s97
      %s98 = sphi 0, %s95
      %s99 = sphi 0, %s98
      %s115 = sphi 0, %s99
      %s121 = sphi 0, %s123
      %s124 = sphi 0, %s121
      %s125 = sphi 0, %s124
      %s141 = sphi 0, %s125
      %s147 = sphi 0, %s149
      %s150 = sphi 0, %s147
      %s151 = sphi 0, %s150
      %s167 = sphi 0, %s151
      %s173 = sphi 0, %s175
      %s176 = sphi 0, %s173
      %s177 = sphi 0, %s176
      %s193 = sphi 0, %s177
      %s199 = sphi 0, %s201
      %s202 = sphi 0, %s199
      %s203 = sphi 0, %s202
      %s219 = sphi 0, %s203
      %s225 = sphi 0, %s227
      %s228 = sphi 0, %s225
      %s229 = sphi 0, %s228
      %s245 = sphi 0, %s229
      %s251 = sphi 0, %s253
      %s254 = sphi 0, %s251
      %s255 = sphi 0, %s254
      %s271 = sphi 0, %s255
      %s277 = sphi 0, %s279
      %s280 = sphi 0, %s277
      %s281 = sphi 0, %s280
      %s297 = sphi 0, %s281
      %s303 = sphi 0, %s305
      %s306 = sphi 0, %s303
      %s307 = sphi 0, %s306
      %s323 = sphi 0, %s307
      %s329 = sphi 0, %s331
      %s332 = sphi 0, %s329
      %s333 = sphi 0, %s332
      %s349 = sphi 0, %s333
      %s353 = sphi 0, %s353
      %s355 = sphi 0, %s353
      %s356 = sphi 0, %s355
      %s370 = sphi 0, %s356
      %s374 = sphi 0, %s374
      %s376 = sphi 0, %s374
      %s377 = sphi 0, %s376
      %s391 = sphi 0, %s377
      %s397 = sphi 0, %s399
      %s400 = sphi 0, %s397
      %s401 = sphi 0, %s400
      %s417 = sphi 0, %s401
    $region4: #{tpu_custom_call.1} parent=1 // loop_header_branch
      %24 = sbr.rel (%p22) target = $region8
    $region5: #{tpu_custom_call.1} parent=1 // loop_body
      %s26 = ssub.s32 %s21, 1
      %s27 = ssub.s32 %s21, 2
      %s34 = sadd.s32 1, %s29
      %p35 = scmp.ge.s32.totalorder %s34, 2
      %s36 = scalar_select %p35, 0, %s34
      %s37 = sadd.s32 1, %s28
      %s38 = scalar_select %p35, %s37, %s28
      %p39 = scmp.ge.s32.totalorder %s38, 1
      %s40 = scalar_select %p39, 0, %s38
      %s41 = ssub.s32 %s28, %s40
      %p42 = scmp.eq.s32.totalorder %s41, 0
      %s44 = sadd.s32 %s43, 1
      %s45 = scalar_select %p42, %s43, %s44
      %p48 = pneg %p42
      %p49 = scmp.eq.s32.totalorder %s21, 1
      %p50 = por %p48, %p49
      %p51 = scmp.ne.s32.totalorder %s43, %s46
      %p52 = scmp.eq.s32.totalorder %s21, 0
      %p53 = por %p51, %p52
      %p54 = scmp.ne.s32.totalorder %s43, %s46
      %p55 = scmp.eq.s32.totalorder %s26, 1
      %p56 = por %p54, %p55
      %p57 = scmp.ne.s32.totalorder %s46, %s47
      %p58 = scmp.eq.s32.totalorder %s26, 0
      %p59 = por %p57, %p58
      %p60 = scmp.ne.s32.totalorder %s46, %s47
      %p61 = scmp.eq.s32.totalorder %s27, 1
      %p62 = por %p60, %p61
      %p64 = scmp.ne.s32.totalorder %s47, %s63
      %p65 = scmp.eq.s32.totalorder %s27, 0
      %p66 = por %p64, %p65
      %s67 = ssub.s32 %s29, %s36
      %p68 = scmp.eq.s32.totalorder %s67, 0
      %s70 = sadd.s32 %s69, 1
      %s71 = scalar_select %p68, %s69, %s70
      %p74 = pneg %p68
      %p75 = scmp.eq.s32.totalorder %s21, 1
      %p76 = por %p74, %p75
      %p77 = scmp.ne.s32.totalorder %s69, %s72
      %p78 = scmp.eq.s32.totalorder %s21, 0
      %p79 = por %p77, %p78
      %p80 = scmp.ne.s32.totalorder %s69, %s72
      %p81 = scmp.eq.s32.totalorder %s26, 1
      %p82 = por %p80, %p81
      %p83 = scmp.ne.s32.totalorder %s72, %s73
      %p84 = scmp.eq.s32.totalorder %s26, 0
      %p85 = por %p83, %p84
      %p86 = scmp.ne.s32.totalorder %s72, %s73
      %p87 = scmp.eq.s32.totalorder %s27, 1
      %p88 = por %p86, %p87
      %p90 = scmp.ne.s32.totalorder %s73, %s89
      %p91 = scmp.eq.s32.totalorder %s27, 0
      %p92 = por %p90, %p91
      %s93 = ssub.s32 %s29, %s36
      %p94 = scmp.eq.s32.totalorder %s93, 0
      %s96 = sadd.s32 %s95, 1
      %s97 = scalar_select %p94, %s95, %s96
      %p100 = pneg %p94
      %p101 = scmp.eq.s32.totalorder %s21, 1
      %p102 = por %p100, %p101
      %p103 = scmp.ne.s32.totalorder %s95, %s98
      %p104 = scmp.eq.s32.totalorder %s21, 0
      %p105 = por %p103, %p104
      %p106 = scmp.ne.s32.totalorder %s95, %s98
      %p107 = scmp.eq.s32.totalorder %s26, 1
      %p108 = por %p106, %p107
      %p109 = scmp.ne.s32.totalorder %s98, %s99
      %p110 = scmp.eq.s32.totalorder %s26, 0
      %p111 = por %p109, %p110
      %p112 = scmp.ne.s32.totalorder %s98, %s99
      %p113 = scmp.eq.s32.totalorder %s27, 1
      %p114 = por %p112, %p113
      %p116 = scmp.ne.s32.totalorder %s99, %s115
      %p117 = scmp.eq.s32.totalorder %s27, 0
      %p118 = por %p116, %p117
      %s119 = ssub.s32 %s29, %s36
      %p120 = scmp.eq.s32.totalorder %s119, 0
      %s122 = sadd.s32 %s121, 1
      %s123 = scalar_select %p120, %s121, %s122
      %p126 = pneg %p120
      %p127 = scmp.eq.s32.totalorder %s21, 1
      %p128 = por %p126, %p127
      %p129 = scmp.ne.s32.totalorder %s121, %s124
      %p130 = scmp.eq.s32.totalorder %s21, 0
      %p131 = por %p129, %p130
      %p132 = scmp.ne.s32.totalorder %s121, %s124
      %p133 = scmp.eq.s32.totalorder %s26, 1
      %p134 = por %p132, %p133
      %p135 = scmp.ne.s32.totalorder %s124, %s125
      %p136 = scmp.eq.s32.totalorder %s26, 0
      %p137 = por %p135, %p136
      %p138 = scmp.ne.s32.totalorder %s124, %s125
      %p139 = scmp.eq.s32.totalorder %s27, 1
      %p140 = por %p138, %p139
      %p142 = scmp.ne.s32.totalorder %s125, %s141
      %p143 = scmp.eq.s32.totalorder %s27, 0
      %p144 = por %p142, %p143
      %s145 = ssub.s32 %s29, %s36
      %p146 = scmp.eq.s32.totalorder %s145, 0
      %s148 = sadd.s32 %s147, 1
      %s149 = scalar_select %p146, %s147, %s148
      %p152 = pneg %p146
      %p153 = scmp.eq.s32.totalorder %s21, 1
      %p154 = por %p152, %p153
      %p155 = scmp.ne.s32.totalorder %s147, %s150
      %p156 = scmp.eq.s32.totalorder %s21, 0
      %p157 = por %p155, %p156
      %p158 = scmp.ne.s32.totalorder %s147, %s150
      %p159 = scmp.eq.s32.totalorder %s26, 1
      %p160 = por %p158, %p159
      %p161 = scmp.ne.s32.totalorder %s150, %s151
      %p162 = scmp.eq.s32.totalorder %s26, 0
      %p163 = por %p161, %p162
      %p164 = scmp.ne.s32.totalorder %s150, %s151
      %p165 = scmp.eq.s32.totalorder %s27, 1
      %p166 = por %p164, %p165
      %p168 = scmp.ne.s32.totalorder %s151, %s167
      %p169 = scmp.eq.s32.totalorder %s27, 0
      %p170 = por %p168, %p169
      %s171 = ssub.s32 %s29, %s36
      %p172 = scmp.eq.s32.totalorder %s171, 0
      %s174 = sadd.s32 %s173, 1
      %s175 = scalar_select %p172, %s173, %s174
      %p178 = pneg %p172
      %p179 = scmp.eq.s32.totalorder %s21, 1
      %p180 = por %p178, %p179
      %p181 = scmp.ne.s32.totalorder %s173, %s176
      %p182 = scmp.eq.s32.totalorder %s21, 0
      %p183 = por %p181, %p182
      %p184 = scmp.ne.s32.totalorder %s173, %s176
      %p185 = scmp.eq.s32.totalorder %s26, 1
      %p186 = por %p184, %p185
      %p187 = scmp.ne.s32.totalorder %s176, %s177
      %p188 = scmp.eq.s32.totalorder %s26, 0
      %p189 = por %p187, %p188
      %p190 = scmp.ne.s32.totalorder %s176, %s177
      %p191 = scmp.eq.s32.totalorder %s27, 1
      %p192 = por %p190, %p191
      %p194 = scmp.ne.s32.totalorder %s177, %s193
      %p195 = scmp.eq.s32.totalorder %s27, 0
      %p196 = por %p194, %p195
      %s197 = ssub.s32 %s29, %s36
      %p198 = scmp.eq.s32.totalorder %s197, 0
      %s200 = sadd.s32 %s199, 1
      %s201 = scalar_select %p198, %s199, %s200
      %p204 = pneg %p198
      %p205 = scmp.eq.s32.totalorder %s21, 1
      %p206 = por %p204, %p205
      %p207 = scmp.ne.s32.totalorder %s199, %s202
      %p208 = scmp.eq.s32.totalorder %s21, 0
      %p209 = por %p207, %p208
      %p210 = scmp.ne.s32.totalorder %s199, %s202
      %p211 = scmp.eq.s32.totalorder %s26, 1
      %p212 = por %p210, %p211
      %p213 = scmp.ne.s32.totalorder %s202, %s203
      %p214 = scmp.eq.s32.totalorder %s26, 0
      %p215 = por %p213, %p214
      %p216 = scmp.ne.s32.totalorder %s202, %s203
      %p217 = scmp.eq.s32.totalorder %s27, 1
      %p218 = por %p216, %p217
      %p220 = scmp.ne.s32.totalorder %s203, %s219
      %p221 = scmp.eq.s32.totalorder %s27, 0
      %p222 = por %p220, %p221
      %s223 = ssub.s32 %s29, %s36
      %p224 = scmp.eq.s32.totalorder %s223, 0
      %s226 = sadd.s32 %s225, 1
      %s227 = scalar_select %p224, %s225, %s226
      %p230 = pneg %p224
      %p231 = scmp.eq.s32.totalorder %s21, 1
      %p232 = por %p230, %p231
      %p233 = scmp.ne.s32.totalorder %s225, %s228
      %p234 = scmp.eq.s32.totalorder %s21, 0
      %p235 = por %p233, %p234
      %p236 = scmp.ne.s32.totalorder %s225, %s228
      %p237 = scmp.eq.s32.totalorder %s26, 1
      %p238 = por %p236, %p237
      %p239 = scmp.ne.s32.totalorder %s228, %s229
      %p240 = scmp.eq.s32.totalorder %s26, 0
      %p241 = por %p239, %p240
      %p242 = scmp.ne.s32.totalorder %s228, %s229
      %p243 = scmp.eq.s32.totalorder %s27, 1
      %p244 = por %p242, %p243
      %p246 = scmp.ne.s32.totalorder %s229, %s245
      %p247 = scmp.eq.s32.totalorder %s27, 0
      %p248 = por %p246, %p247
      %s249 = ssub.s32 %s29, %s36
      %p250 = scmp.eq.s32.totalorder %s249, 0
      %s252 = sadd.s32 %s251, 1
      %s253 = scalar_select %p250, %s251, %s252
      %p256 = pneg %p250
      %p257 = scmp.eq.s32.totalorder %s21, 1
      %p258 = por %p256, %p257
      %p259 = scmp.ne.s32.totalorder %s251, %s254
      %p260 = scmp.eq.s32.totalorder %s21, 0
      %p261 = por %p259, %p260
      %p262 = scmp.ne.s32.totalorder %s251, %s254
      %p263 = scmp.eq.s32.totalorder %s26, 1
      %p264 = por %p262, %p263
      %p265 = scmp.ne.s32.totalorder %s254, %s255
      %p266 = scmp.eq.s32.totalorder %s26, 0
      %p267 = por %p265, %p266
      %p268 = scmp.ne.s32.totalorder %s254, %s255
      %p269 = scmp.eq.s32.totalorder %s27, 1
      %p270 = por %p268, %p269
      %p272 = scmp.ne.s32.totalorder %s255, %s271
      %p273 = scmp.eq.s32.totalorder %s27, 0
      %p274 = por %p272, %p273
      %s275 = ssub.s32 %s29, %s36
      %p276 = scmp.eq.s32.totalorder %s275, 0
      %s278 = sadd.s32 %s277, 1
      %s279 = scalar_select %p276, %s277, %s278
      %p282 = pneg %p276
      %p283 = scmp.eq.s32.totalorder %s21, 1
      %p284 = por %p282, %p283
      %p285 = scmp.ne.s32.totalorder %s277, %s280
      %p286 = scmp.eq.s32.totalorder %s21, 0
      %p287 = por %p285, %p286
      %p288 = scmp.ne.s32.totalorder %s277, %s280
      %p289 = scmp.eq.s32.totalorder %s26, 1
      %p290 = por %p288, %p289
      %p291 = scmp.ne.s32.totalorder %s280, %s281
      %p292 = scmp.eq.s32.totalorder %s26, 0
      %p293 = por %p291, %p292
      %p294 = scmp.ne.s32.totalorder %s280, %s281
      %p295 = scmp.eq.s32.totalorder %s27, 1
      %p296 = por %p294, %p295
      %p298 = scmp.ne.s32.totalorder %s281, %s297
      %p299 = scmp.eq.s32.totalorder %s27, 0
      %p300 = por %p298, %p299
      %s301 = ssub.s32 %s29, %s36
      %p302 = scmp.eq.s32.totalorder %s301, 0
      %s304 = sadd.s32 %s303, 1
      %s305 = scalar_select %p302, %s303, %s304
      %p308 = pneg %p302
      %p309 = scmp.eq.s32.totalorder %s21, 1
      %p310 = por %p308, %p309
      %p311 = scmp.ne.s32.totalorder %s303, %s306
      %p312 = scmp.eq.s32.totalorder %s21, 0
      %p313 = por %p311, %p312
      %p314 = scmp.ne.s32.totalorder %s303, %s306
      %p315 = scmp.eq.s32.totalorder %s26, 1
      %p316 = por %p314, %p315
      %p317 = scmp.ne.s32.totalorder %s306, %s307
      %p318 = scmp.eq.s32.totalorder %s26, 0
      %p319 = por %p317, %p318
      %p320 = scmp.ne.s32.totalorder %s306, %s307
      %p321 = scmp.eq.s32.totalorder %s27, 1
      %p322 = por %p320, %p321
      %p324 = scmp.ne.s32.totalorder %s307, %s323
      %p325 = scmp.eq.s32.totalorder %s27, 0
      %p326 = por %p324, %p325
      %s327 = ssub.s32 %s29, %s36
      %p328 = scmp.eq.s32.totalorder %s327, 0
      %s330 = sadd.s32 %s329, 1
      %s331 = scalar_select %p328, %s329, %s330
      %p334 = pneg %p328
      %p335 = scmp.eq.s32.totalorder %s21, 1
      %p336 = por %p334, %p335
      %p337 = scmp.ne.s32.totalorder %s329, %s332
      %p338 = scmp.eq.s32.totalorder %s21, 0
      %p339 = por %p337, %p338
      %p340 = scmp.ne.s32.totalorder %s329, %s332
      %p341 = scmp.eq.s32.totalorder %s26, 1
      %p342 = por %p340, %p341
      %p343 = scmp.ne.s32.totalorder %s332, %s333
      %p344 = scmp.eq.s32.totalorder %s26, 0
      %p345 = por %p343, %p344
      %p346 = scmp.ne.s32.totalorder %s332, %s333
      %p347 = scmp.eq.s32.totalorder %s27, 1
      %p348 = por %p346, %p347
      %p350 = scmp.ne.s32.totalorder %s333, %s349
      %p351 = scmp.eq.s32.totalorder %s27, 0
      %p352 = por %p350, %p351
      %s354 = sadd.s32 %s353, 1
      %p357 = scmp.eq.s32.totalorder %s21, 1
      %p358 = scmp.ne.s32.totalorder %s353, %s355
      %p359 = scmp.eq.s32.totalorder %s21, 0
      %p360 = por %p358, %p359
      %p361 = scmp.ne.s32.totalorder %s353, %s355
      %p362 = scmp.eq.s32.totalorder %s26, 1
      %p363 = por %p361, %p362
      %p364 = scmp.ne.s32.totalorder %s355, %s356
      %p365 = scmp.eq.s32.totalorder %s26, 0
      %p366 = por %p364, %p365
      %p367 = scmp.ne.s32.totalorder %s355, %s356
      %p368 = scmp.eq.s32.totalorder %s27, 1
      %p369 = por %p367, %p368
      %p371 = scmp.ne.s32.totalorder %s356, %s370
      %p372 = scmp.eq.s32.totalorder %s27, 0
      %p373 = por %p371, %p372
      %s375 = sadd.s32 %s374, 1
      %p378 = scmp.eq.s32.totalorder %s21, 1
      %p379 = scmp.ne.s32.totalorder %s374, %s376
      %p380 = scmp.eq.s32.totalorder %s21, 0
      %p381 = por %p379, %p380
      %p382 = scmp.ne.s32.totalorder %s374, %s376
      %p383 = scmp.eq.s32.totalorder %s26, 1
      %p384 = por %p382, %p383
      %p385 = scmp.ne.s32.totalorder %s376, %s377
      %p386 = scmp.eq.s32.totalorder %s26, 0
      %p387 = por %p385, %p386
      %p388 = scmp.ne.s32.totalorder %s376, %s377
      %p389 = scmp.eq.s32.totalorder %s27, 1
      %p390 = por %p388, %p389
      %p392 = scmp.ne.s32.totalorder %s377, %s391
      %p393 = scmp.eq.s32.totalorder %s27, 0
      %p394 = por %p392, %p393
      %s395 = ssub.s32 %s28, %s40
      %p396 = scmp.eq.s32.totalorder %s395, 0
      %s398 = sadd.s32 %s397, 1
      %s399 = scalar_select %p396, %s397, %s398
      %p402 = pneg %p396
      %p403 = scmp.eq.s32.totalorder %s21, 1
      %p404 = por %p402, %p403
      %p405 = scmp.ne.s32.totalorder %s397, %s400
      %p406 = scmp.eq.s32.totalorder %s21, 0
      %p407 = por %p405, %p406
      %p408 = scmp.ne.s32.totalorder %s397, %s400
      %p409 = scmp.eq.s32.totalorder %s26, 1
      %p410 = por %p408, %p409
      %p411 = scmp.ne.s32.totalorder %s400, %s401
      %p412 = scmp.eq.s32.totalorder %s26, 0
      %p413 = por %p411, %p412
      %p414 = scmp.ne.s32.totalorder %s400, %s401
      %p415 = scmp.eq.s32.totalorder %s27, 1
      %p416 = por %p414, %p415
      %p418 = scmp.ne.s32.totalorder %s401, %s417
      %p419 = scmp.eq.s32.totalorder %s27, 0
      %p420 = por %p418, %p419
      %p421 = scmp.le.s32.totalorder 1, %s21
      %p422 = scmp.lt.s32.totalorder %s21, 3
      %p423 = pnand %p421, %p422
      %p424 = pneg %p423
      // Predicated region
      $region9: #{tpu_custom_call.1} parent=5 // pred_check
        _
      $region10: #{tpu_custom_call.1} parent=5 // pred_check_branch
        %426 = sbr.rel (%p423) target = $region12
      $region11: #{tpu_custom_call.1} parent=5 // pred_region
        %s427 = ssub.s32 %s21, 1
        // Predicated region
        $region13: #{tpu_custom_call.1} parent=11 // pred_check
          %p428 = pneg %p59
        $region14: #{tpu_custom_call.1} parent=11 // pred_check_branch
          %430 = sbr.rel (%p428) target = $region16
        $region15: #{tpu_custom_call.1} parent=11 // pred_region
          %s431 = smul.u32 2, %s30
          %p432 = scmp.lt.s32.totalorder %s431, 1
          %s433 = scalar_select %p432, %s431, 1
          %s434 = smul.addr %s433, 8
          %s435 = scalar_lea.vmem %s0, %s434
          %s436 = smul.u32 2, %s30
        $region16: #{tpu_custom_call.1} parent=11 // pred_fallthru
          _
        // Predicated region
        $region17: #{tpu_custom_call.1} parent=11 // pred_check
          %p437 = pneg %p366
        $region18: #{tpu_custom_call.1} parent=11 // pred_check_branch
          %439 = sbr.rel (%p437) target = $region20
        $region19: #{tpu_custom_call.1} parent=11 // pred_region
          _
        $region20: #{tpu_custom_call.1} parent=11 // pred_fallthru
          _
        // Predicated region
        $region21: #{tpu_custom_call.1} parent=11 // pred_check
          %p440 = pneg %p387
        $region22: #{tpu_custom_call.1} parent=11 // pred_check_branch
          %442 = sbr.rel (%p440) target = $region24
        $region23: #{tpu_custom_call.1} parent=11 // pred_region
          _
        $region24: #{tpu_custom_call.1} parent=11 // pred_fallthru
          _
      $region12: #{tpu_custom_call.1} parent=5 // pred_fallthru
        _
      %p443 = scmp.lt.s32.totalorder %s21, 2
      // Predicated region
      $region25: #{tpu_custom_call.1} parent=5 // pred_check
        %p444 = pneg %p443
      $region26: #{tpu_custom_call.1} parent=5 // pred_check_branch
        %446 = sbr.rel (%p444) target = $region28
      $region27: #{tpu_custom_call.1} parent=5 // pred_region
        // Predicated region
        $region29: #{tpu_custom_call.1} parent=27 // pred_check
          %p447 = pneg %p79
        $region30: #{tpu_custom_call.1} parent=27 // pred_check_branch
          %449 = sbr.rel (%p447) target = $region32
        $region31: #{tpu_custom_call.1} parent=27 // pred_region
          %p450 = scmp.lt.s32.totalorder %s29, 1
          %s451 = scalar_select %p450, %s29, 1
          %s452 = scalar_lea.vmem %s1, %s451
        $region32: #{tpu_custom_call.1} parent=27 // pred_fallthru
          _
        // Predicated region
        $region33: #{tpu_custom_call.1} parent=27 // pred_check
          %p453 = pneg %p105
        $region34: #{tpu_custom_call.1} parent=27 // pred_check_branch
          %455 = sbr.rel (%p453) target = $region36
        $region35: #{tpu_custom_call.1} parent=27 // pred_region
          %p456 = scmp.lt.s32.totalorder %s29, 1
          %s457 = scalar_select %p456, %s29, 1
          %s458 = scalar_lea.vmem %s2, %s457
        $region36: #{tpu_custom_call.1} parent=27 // pred_fallthru
          _
        // Predicated region
        $region37: #{tpu_custom_call.1} parent=27 // pred_check
          %p459 = pneg %p131
        $region38: #{tpu_custom_call.1} parent=27 // pred_check_branch
          %461 = sbr.rel (%p459) target = $region40
        $region39: #{tpu_custom_call.1} parent=27 // pred_region
          %p462 = scmp.lt.s32.totalorder %s29, 1
          %s463 = scalar_select %p462, %s29, 1
          %s464 = smul.addr %s463, 4
          %s465 = smul.addr %s464, 4
          %s466 = scalar_lea.vmem %s3, %s465
        $region40: #{tpu_custom_call.1} parent=27 // pred_fallthru
          _
        // Predicated region
        $region41: #{tpu_custom_call.1} parent=27 // pred_check
          %p467 = pneg %p157
        $region42: #{tpu_custom_call.1} parent=27 // pred_check_branch
          %469 = sbr.rel (%p467) target = $region44
        $region43: #{tpu_custom_call.1} parent=27 // pred_region
          %p470 = scmp.lt.s32.totalorder %s29, 1
          %s471 = scalar_select %p470, %s29, 1
          %s472 = smul.addr %s471, 4
          %s473 = smul.addr %s472, 4
          %s474 = scalar_lea.vmem %s4, %s473
        $region44: #{tpu_custom_call.1} parent=27 // pred_fallthru
          _
        // Predicated region
        $region45: #{tpu_custom_call.1} parent=27 // pred_check
          %p475 = pneg %p183
        $region46: #{tpu_custom_call.1} parent=27 // pred_check_branch
          %477 = sbr.rel (%p475) target = $region48
        $region47: #{tpu_custom_call.1} parent=27 // pred_region
          %p478 = scmp.lt.s32.totalorder %s29, 1
          %s479 = scalar_select %p478, %s29, 1
          %s480 = scalar_lea.vmem %s5, %s479
        $region48: #{tpu_custom_call.1} parent=27 // pred_fallthru
          _
        // Predicated region
        $region49: #{tpu_custom_call.1} parent=27 // pred_check
          %p481 = pneg %p209
        $region50: #{tpu_custom_call.1} parent=27 // pred_check_branch
          %483 = sbr.rel (%p481) target = $region52
        $region51: #{tpu_custom_call.1} parent=27 // pred_region
          %p484 = scmp.lt.s32.totalorder %s29, 1
          %s485 = scalar_select %p484, %s29, 1
          %s486 = scalar_lea.vmem %s6, %s485
        $region52: #{tpu_custom_call.1} parent=27 // pred_fallthru
          _
        // Predicated region
        $region53: #{tpu_custom_call.1} parent=27 // pred_check
          %p487 = pneg %p235
        $region54: #{tpu_custom_call.1} parent=27 // pred_check_branch
          %489 = sbr.rel (%p487) target = $region56
        $region55: #{tpu_custom_call.1} parent=27 // pred_region
          %p490 = scmp.lt.s32.totalorder %s29, 1
          %s491 = scalar_select %p490, %s29, 1
          %s492 = scalar_lea.vmem %s7, %s491
        $region56: #{tpu_custom_call.1} parent=27 // pred_fallthru
          _
        // Predicated region
        $region57: #{tpu_custom_call.1} parent=27 // pred_check
          %p493 = pneg %p261
        $region58: #{tpu_custom_call.1} parent=27 // pred_check_branch
          %495 = sbr.rel (%p493) target = $region60
        $region59: #{tpu_custom_call.1} parent=27 // pred_region
          %p496 = scmp.lt.s32.totalorder %s29, 1
          %s497 = scalar_select %p496, %s29, 1
          %s498 = smul.addr %s497, 4
          %s499 = smul.addr %s498, 4
          %s500 = scalar_lea.vmem %s8, %s499
        $region60: #{tpu_custom_call.1} parent=27 // pred_fallthru
          _
        // Predicated region
        $region61: #{tpu_custom_call.1} parent=27 // pred_check
          %p501 = pneg %p287
        $region62: #{tpu_custom_call.1} parent=27 // pred_check_branch
          %503 = sbr.rel (%p501) target = $region64
        $region63: #{tpu_custom_call.1} parent=27 // pred_region
          %p504 = scmp.lt.s32.totalorder %s29, 1
          %s505 = scalar_select %p504, %s29, 1
          %s506 = scalar_lea.vmem %s9, %s505
        $region64: #{tpu_custom_call.1} parent=27 // pred_fallthru
          _
        // Predicated region
        $region65: #{tpu_custom_call.1} parent=27 // pred_check
          %p507 = pneg %p313
        $region66: #{tpu_custom_call.1} parent=27 // pred_check_branch
          %509 = sbr.rel (%p507) target = $region68
        $region67: #{tpu_custom_call.1} parent=27 // pred_region
          %p510 = scmp.lt.s32.totalorder %s29, 1
          %s511 = scalar_select %p510, %s29, 1
          %s512 = smul.addr %s511, 16
          %s513 = smul.addr %s512, 4
          %s514 = scalar_lea.vmem %s10, %s513
        $region68: #{tpu_custom_call.1} parent=27 // pred_fallthru
          _
        // Predicated region
        $region69: #{tpu_custom_call.1} parent=27 // pred_check
          %p515 = pneg %p339
        $region70: #{tpu_custom_call.1} parent=27 // pred_check_branch
          %517 = sbr.rel (%p515) target = $region72
        $region71: #{tpu_custom_call.1} parent=27 // pred_region
          %p518 = scmp.lt.s32.totalorder %s29, 1
          %s519 = scalar_select %p518, %s29, 1
          %s520 = scalar_lea.vmem %s11, %s519
        $region72: #{tpu_custom_call.1} parent=27 // pred_fallthru
          _
      $region28: #{tpu_custom_call.1} parent=5 // pred_fallthru
        _
      %p521 = scmp.le.s32.totalorder 1, %s21
      %p522 = scmp.lt.s32.totalorder %s21, 3
      %p523 = pnand %p521, %p522
      %p524 = pneg %p523
      // Predicated region
      $region73: #{tpu_custom_call.1} parent=5 // pred_check
        _
      $region74: #{tpu_custom_call.1} parent=5 // pred_check_branch
        %526 = sbr.rel (%p523) target = $region76
      $region75: #{tpu_custom_call.1} parent=5 // pred_region
        %s527 = ssub.s32 %s21, 1
        %s528 = smul.u32 2, %s30
        %p529 = scmp.lt.s32.totalorder %s528, 1
        %s530 = scalar_select %p529, %s528, 1
        %s531 = smul.addr %s530, 8
        %s532 = scalar_lea.vmem %s0, %s531
        %p533 = pneg %p59
        %p534 = pneg %p56
        %p535 = scmp.lt.s32.totalorder %s31, 1
        %s536 = scalar_select %p535, %s31, 1
        %s537 = scalar_lea.vmem %s1, %s536
        %p538 = pneg %p85
        %p539 = pneg %p82
        %p540 = scmp.lt.s32.totalorder %s31, 1
        %s541 = scalar_select %p540, %s31, 1
        %s542 = scalar_lea.vmem %s2, %s541
        %p543 = pneg %p111
        %p544 = pneg %p108
        %p545 = scmp.lt.s32.totalorder %s31, 1
        %s546 = scalar_select %p545, %s31, 1
        %s547 = smul.addr %s546, 4
        %s548 = smul.addr %s547, 4
        %s549 = scalar_lea.vmem %s3, %s548
        %p550 = pneg %p137
        %p551 = pneg %p134
        %p552 = scmp.lt.s32.totalorder %s31, 1
        %s553 = scalar_select %p552, %s31, 1
        %s554 = smul.addr %s553, 4
        %s555 = smul.addr %s554, 4
        %s556 = scalar_lea.vmem %s4, %s555
        %p557 = pneg %p163
        %p558 = pneg %p160
        %p559 = scmp.lt.s32.totalorder %s31, 1
        %s560 = scalar_select %p559, %s31, 1
        %s561 = scalar_lea.vmem %s5, %s560
        %p562 = pneg %p189
        %p563 = pneg %p186
        %p564 = scmp.lt.s32.totalorder %s31, 1
        %s565 = scalar_select %p564, %s31, 1
        %s566 = scalar_lea.vmem %s6, %s565
        %p567 = pneg %p215
        %p568 = pneg %p212
        %p569 = scmp.lt.s32.totalorder %s31, 1
        %s570 = scalar_select %p569, %s31, 1
        %s571 = scalar_lea.vmem %s7, %s570
        %p572 = pneg %p241
        %p573 = pneg %p238
        %p574 = scmp.lt.s32.totalorder %s31, 1
        %s575 = scalar_select %p574, %s31, 1
        %s576 = smul.addr %s575, 4
        %s577 = smul.addr %s576, 4
        %s578 = scalar_lea.vmem %s8, %s577
        %p579 = pneg %p267
        %p580 = pneg %p264
        %p581 = scmp.lt.s32.totalorder %s31, 1
        %s582 = scalar_select %p581, %s31, 1
        %s583 = scalar_lea.vmem %s9, %s582
        %p584 = pneg %p293
        %p585 = pneg %p290
        %p586 = scmp.lt.s32.totalorder %s31, 1
        %s587 = scalar_select %p586, %s31, 1
        %s588 = smul.addr %s587, 16
        %s589 = smul.addr %s588, 4
        %s590 = scalar_lea.vmem %s10, %s589
        %p591 = pneg %p319
        %p592 = pneg %p316
        %p593 = scmp.lt.s32.totalorder %s31, 1
        %s594 = scalar_select %p593, %s31, 1
        %s595 = scalar_lea.vmem %s11, %s594
        %p596 = pneg %p345
        %p597 = pneg %p342
        %p598 = pneg %p366
        %p599 = pneg %p363
        %p600 = pneg %p387
        %p601 = pneg %p384
        %p602 = pneg %p413
        %p603 = pneg %p410
        %s604 = smul.u32 2, %s30
        %p605 = scmp.lt.s32.totalorder %s604, 1
        %s606 = scalar_select %p605, %s604, 1
        %s607 = smul.addr %s606, 8
        %s608 = scalar_lea.vmem %s0, %s607
        %s609 = smul.u32 2, %s30
        %p610 = scmp.lt.s32.totalorder %s31, 1
        %s611 = scalar_select %p610, %s31, 1
        %s612 = scalar_lea.vmem %s1, %s611
        %p613 = scmp.lt.s32.totalorder %s31, 1
        %s614 = scalar_select %p613, %s31, 1
        %s615 = scalar_lea.vmem %s2, %s614
        %p616 = scmp.lt.s32.totalorder %s31, 1
        %s617 = scalar_select %p616, %s31, 1
        %s618 = smul.addr %s617, 4
        %s619 = smul.addr %s618, 4
        %s620 = scalar_lea.vmem %s3, %s619
        %p621 = scmp.lt.s32.totalorder %s31, 1
        %s622 = scalar_select %p621, %s31, 1
        %s623 = smul.addr %s622, 4
        %s624 = smul.addr %s623, 4
        %s625 = scalar_lea.vmem %s4, %s624
        %p626 = scmp.lt.s32.totalorder %s31, 1
        %s627 = scalar_select %p626, %s31, 1
        %s628 = scalar_lea.vmem %s5, %s627
        %p629 = scmp.lt.s32.totalorder %s31, 1
        %s630 = scalar_select %p629, %s31, 1
        %s631 = scalar_lea.vmem %s6, %s630
        %p632 = scmp.lt.s32.totalorder %s31, 1
        %s633 = scalar_select %p632, %s31, 1
        %s634 = scalar_lea.vmem %s7, %s633
        %p635 = scmp.lt.s32.totalorder %s31, 1
        %s636 = scalar_select %p635, %s31, 1
        %s637 = smul.addr %s636, 4
        %s638 = smul.addr %s637, 4
        %s639 = scalar_lea.vmem %s8, %s638
        %p640 = scmp.lt.s32.totalorder %s31, 1
        %s641 = scalar_select %p640, %s31, 1
        %s642 = scalar_lea.vmem %s9, %s641
        %p643 = scmp.lt.s32.totalorder %s31, 1
        %s644 = scalar_select %p643, %s31, 1
        %s645 = smul.addr %s644, 16
        %s646 = smul.addr %s645, 4
        %s647 = scalar_lea.vmem %s10, %s646
        %p648 = scmp.lt.s32.totalorder %s31, 1
        %s649 = scalar_select %p648, %s31, 1
        %s650 = scalar_lea.vmem %s11, %s649
        %s651 = smul.u32 2, %s30
        %p653 = scmp.eq.s32.totalorder %s31, 0
        // Predicated region
        $region77: #{tpu_custom_call.1} parent=75 // pred_check
          %p654 = pneg %p653
        $region78: #{tpu_custom_call.1} parent=75 // pred_check_branch
          %656 = sbr.rel (%p654) target = $region80
        $region79: #{tpu_custom_call.1} parent=75 // pred_region
          %v657 = vld [vmem:[%s608] sm:$0xff]
          %v658 = vld [vmem:[%s608 + $0x8] sm:$0xff]
          %vm659 = vcmask 261120
          %660 = vst.msk [vmem:[#allocation2] sm:$0xff] %vm659, %v657
          %661 = vst.msk [vmem:[#allocation2 + $0x8] sm:$0xff] %vm659, %v658
        $region80: #{tpu_custom_call.1} parent=75 // pred_fallthru
          _
        %v662 = vld [vmem:[#allocation2] sm:$0xff]
        %v663 = vld [vmem:[#allocation2 + $0x8] sm:$0xff]
        %v664 = vld [vmem:[%s612] sm:$0x1]
        %v665 = vld [vmem:[%s615] sm:$0x1]
        %vm666 = vcmask 261120
        %v667 = vsel %vm666, %v662, 0.0
        %668 = vadd.xlane.f32.xlu0 %v667
        %v669 = vpop.xlane.xlu0 %668
        %v670 = vsel %vm666, %v663, 0.0
        %671 = vadd.xlane.f32.xlu0 %v670
        %v672 = vpop.xlane.xlu0 %671
        %v673 = vrcp.pop 32.0
        %v674 = vmul.f32 32.0, %v673
        %v675 = vsub.f32 1.0, %v674
        %v676 = vmul.f32 %v673, %v675
        %v677 = vadd.f32 %v673, %v676
        %vm678 = vweird.f32 %v673
        %v679 = vsel %vm678, %v673, %v677
        %v680 = vmul.f32 %v669, %v679
        %v681 = vmul.f32 %v672, %v679
        %v682 = vsub.f32 %v662, %v680
        %v683 = vsub.f32 %v663, %v681
        %v684 = vmul.f32 %v682, %v682
        %v685 = vmul.f32 %v683, %v683
        %v686 = vsel %vm666, %v684, 0.0
        %687 = vadd.xlane.f32.xlu0 %v686
        %v688 = vpop.xlane.xlu0 %687
        %v689 = vsel %vm666, %v685, 0.0
        %690 = vadd.xlane.f32.xlu0 %v689
        %v691 = vpop.xlane.xlu0 %690
        %v692 = vmul.f32 %v688, %v679
        %v693 = vmul.f32 %v691, %v679
        %v694 = vadd.f32 %v692, 1e-05
        %v695 = vadd.f32 %v693, 1e-05
        %v696 = vrsqrt.pop %v694
        %v697 = vmul.f32 %v696, %v694
        %v698 = vmul.f32 %v697, %v696
        %v699 = vmul.f32 0.5, %v698
        %v700 = vsub.f32 1.5, %v699
        %v701 = vmul.f32 %v696, %v700
        %vm702 = vweird.f32 %v694
        %vm703 = vweird.f32 %v696
        %vm704 = vmor %vm702, %vm703
        %v705 = vsel %vm704, %v696, %v701
        %v706 = vrsqrt.pop %v695
        %v707 = vmul.f32 %v706, %v695
        %v708 = vmul.f32 %v707, %v706
        %v709 = vmul.f32 0.5, %v708
        %v710 = vsub.f32 1.5, %v709
        %v711 = vmul.f32 %v706, %v710
        %vm712 = vweird.f32 %v695
        %vm713 = vweird.f32 %v706
        %vm714 = vmor %vm712, %vm713
        %v715 = vsel %vm714, %v706, %v711
        %v716 = vmul.f32 %v682, %v705
        %v717 = vmul.f32 %v683, %v715
        %v719 = vperm.slane %v664, 0
        %v721 = vmul.f32 %v716, %v719
        %v722 = vmul.f32 %v717, %v719
        %v724 = vperm.slane %v665, 0
        %v726 = vadd.f32 %v721, %v724
        %v727 = vadd.f32 %v722, %v724
        %v728 = vpack.c.bf16 %v727, %v726
        %v729 = vld [vmem:[%s620] sm:$0xf]
        %v730 = vld [vmem:[%s620 + $0x4] sm:$0xf]
        %v731 = vld [vmem:[%s620 + $0x8] sm:$0xf]
        %v732 = vld [vmem:[%s620 + $0xc] sm:$0xf]
        %v737 = vunpack.c.l.b16 %v729
        %v738 = vunpack.c.l.b16 %v730
        %v739 = vunpack.c.l.b16 %v731
        %v740 = vunpack.c.l.b16 %v732
        %v741 = vpack.c.b16 %v738, %v737
        %v742 = vpack.c.b16 %v740, %v739
        %v746 = vsel %vm666, %v728, 0
        %748 = vmatpush.bf16.msra.mxu0 0
        %749 = vmatpush.bf16.msra.mxu0 0
        %750 = vmatpush.bf16.msra.mxu0 0
        %751 = vmatpush.bf16.msra.mxu0 0
        %752 = vmatpush.bf16.msra.mxu0 0
        %753 = vmatpush.bf16.msra.mxu0 0
        %754 = vmatpush.bf16.msra.mxu0 %v742
        %755 = vmatpush.bf16.msra.mxu0 %v741
        %756 = vmatmul.bf16.gmra.mxu0 %v746
        %v757 = vpop.f32.mrf.mxu0
        %v758 = vadd.f32 0.0, %v757
        %v759 = vpop.f32.mrf.mxu0
        %v760 = vadd.f32 0.0, %v759
        %761 = vdwg.mxu0
        %v762 = vpack.c.bf16 %v758, %v758
        %v763 = vpack.c.bf16 %v760, %v760
        %v764 = vunpack.c.l.bf16 %v762
        %v765 = vunpack.c.l.bf16 %v763
        %v766 = vmul.f32 %v764, 0.35351563
        %v767 = vmul.f32 %v765, 0.35351563
        %v768 = vpack.c.bf16 %v766, %v766
        %v769 = vpack.c.bf16 %v767, %v767
        %772 = vrot.lane.b32.xlu0 %v768, 120
        %v773 = vpop.permute.xlu0 %772
        %774 = vrot.lane.b32.xlu0 %v769, 120
        %v775 = vpop.permute.xlu0 %774
        %776 = vrot.lane.b32.xlu0 %v768, 112
        %v777 = vpop.permute.xlu0 %776
        %778 = vrot.lane.b32.xlu0 %v769, 112
        %v779 = vpop.permute.xlu0 %778
        %780 = vrot.lane.b32.xlu0 %v768, 104
        %v781 = vpop.permute.xlu0 %780
        %782 = vrot.lane.b32.xlu0 %v769, 104
        %v783 = vpop.permute.xlu0 %782
        %786 = vrot.lane.b32.xlu0 %v762, 120
        %v787 = vpop.permute.xlu0 %786
        %788 = vrot.lane.b32.xlu0 %v763, 120
        %v789 = vpop.permute.xlu0 %788
        %790 = vrot.lane.b32.xlu0 %v762, 112
        %v791 = vpop.permute.xlu0 %790
        %792 = vrot.lane.b32.xlu0 %v763, 112
        %v793 = vpop.permute.xlu0 %792
        %794 = vrot.lane.b32.xlu0 %v762, 104
        %v795 = vpop.permute.xlu0 %794
        %796 = vrot.lane.b32.xlu0 %v763, 104
        %v797 = vpop.permute.xlu0 %796
        %v798 = vlaneseq
        %v799 = vshrl.u32 %v798, 7
        %v800 = vlaneseq
        %v801 = vand.u32 %v800, 127
        %v802 = vunpack.c.l.b16 %v762
        %v803 = vpack.c.b16 %v802, %v802
        %804 = vrot.lane.b32.xlu0 %v803, 96
        %v805 = vpop.permute.xlu0 %804
        %vm806 = vcmask 64512
        %v808 = vsel %vm806, %v768, 0
        %v811 = vsel %vm806, %v805, 0
        %813 = vmatpush.bf16.xpose.msra.mxu0 0
        %814 = vmatpush.bf16.xpose.msra.mxu0 0
        %815 = vmatpush.bf16.xpose.msra.mxu0 0
        %816 = vmatpush.bf16.xpose.msra.mxu0 0
        %817 = vmatpush.bf16.xpose.msra.mxu0 0
        %818 = vmatpush.bf16.xpose.msra.mxu0 0
        %819 = vmatpush.bf16.xpose.msra.mxu0 0
        %820 = vmatpush.bf16.xpose.msra.mxu0 %v811
        %821 = vmatmul.bf16.gmra.mxu0 %v808
        %v822 = vpop.f32.mrf.mxu0
        %v823 = vadd.f32 0.0, %v822
        %v824 = vpop.f32.mrf.mxu0
        %825 = vdwg.mxu0
        %v826 = vunpack.c.l.b16 %v763
        %v827 = vpack.c.b16 %v826, %v826
        %828 = vrot.lane.b32.xlu0 %v827, 96
        %v829 = vpop.permute.xlu0 %828
        %v831 = vsel %vm806, %v769, 0
        %v834 = vsel %vm806, %v829, 0
        %836 = vmatpush.bf16.xpose.msra.mxu0 0
        %837 = vmatpush.bf16.xpose.msra.mxu0 0
        %838 = vmatpush.bf16.xpose.msra.mxu0 0
        %839 = vmatpush.bf16.xpose.msra.mxu0 0
        %840 = vmatpush.bf16.xpose.msra.mxu0 0
        %841 = vmatpush.bf16.xpose.msra.mxu0 0
        %842 = vmatpush.bf16.xpose.msra.mxu0 0
        %843 = vmatpush.bf16.xpose.msra.mxu0 %v834
        %844 = vmatmul.bf16.gmra.mxu0 %v831
        %v845 = vpop.f32.mrf.mxu0
        %v846 = vadd.f32 0.0, %v845
        %v847 = vpop.f32.mrf.mxu0
        %848 = vdwg.mxu0
        %v849 = vunpack.c.l.b16 %v787
        %v850 = vpack.c.b16 %v849, %v849
        %851 = vrot.lane.b32.xlu0 %v850, 96
        %v852 = vpop.permute.xlu0 %851
        %v854 = vsel %vm806, %v773, 0
        %v857 = vsel %vm806, %v852, 0
        %859 = vmatpush.bf16.xpose.msra.mxu0 0
        %860 = vmatpush.bf16.xpose.msra.mxu0 0
        %861 = vmatpush.bf16.xpose.msra.mxu0 0
        %862 = vmatpush.bf16.xpose.msra.mxu0 0
        %863 = vmatpush.bf16.xpose.msra.mxu0 0
        %864 = vmatpush.bf16.xpose.msra.mxu0 0
        %865 = vmatpush.bf16.xpose.msra.mxu0 0
        %866 = vmatpush.bf16.xpose.msra.mxu0 %v857
        %867 = vmatmul.bf16.gmra.mxu0 %v854
        %v868 = vpop.f32.mrf.mxu0
        %v869 = vadd.f32 0.0, %v868
        %v870 = vpop.f32.mrf.mxu0
        %871 = vdwg.mxu0
        %v872 = vunpack.c.l.b16 %v789
        %v873 = vpack.c.b16 %v872, %v872
        %874 = vrot.lane.b32.xlu0 %v873, 96
        %v875 = vpop.permute.xlu0 %874
        %v877 = vsel %vm806, %v775, 0
        %v880 = vsel %vm806, %v875, 0
        %882 = vmatpush.bf16.xpose.msra.mxu0 0
        %883 = vmatpush.bf16.xpose.msra.mxu0 0
        %884 = vmatpush.bf16.xpose.msra.mxu0 0
        %885 = vmatpush.bf16.xpose.msra.mxu0 0
        %886 = vmatpush.bf16.xpose.msra.mxu0 0
        %887 = vmatpush.bf16.xpose.msra.mxu0 0
        %888 = vmatpush.bf16.xpose.msra.mxu0 0
        %889 = vmatpush.bf16.xpose.msra.mxu0 %v880
        %890 = vmatmul.bf16.gmra.mxu0 %v877
        %v891 = vpop.f32.mrf.mxu0
        %v892 = vadd.f32 0.0, %v891
        %v893 = vpop.f32.mrf.mxu0
        %894 = vdwg.mxu0
        %v895 = vunpack.c.l.b16 %v791
        %v896 = vpack.c.b16 %v895, %v895
        %897 = vrot.lane.b32.xlu0 %v896, 96
        %v898 = vpop.permute.xlu0 %897
        %v900 = vsel %vm806, %v777, 0
        %v903 = vsel %vm806, %v898, 0
        %905 = vmatpush.bf16.xpose.msra.mxu0 0
        %906 = vmatpush.bf16.xpose.msra.mxu0 0
        %907 = vmatpush.bf16.xpose.msra.mxu0 0
        %908 = vmatpush.bf16.xpose.msra.mxu0 0
        %909 = vmatpush.bf16.xpose.msra.mxu0 0
        %910 = vmatpush.bf16.xpose.msra.mxu0 0
        %911 = vmatpush.bf16.xpose.msra.mxu0 0
        %912 = vmatpush.bf16.xpose.msra.mxu0 %v903
        %913 = vmatmul.bf16.gmra.mxu0 %v900
        %v914 = vpop.f32.mrf.mxu0
        %v915 = vadd.f32 0.0, %v914
        %v916 = vpop.f32.mrf.mxu0
        %917 = vdwg.mxu0
        %v918 = vunpack.c.l.b16 %v793
        %v919 = vpack.c.b16 %v918, %v918
        %920 = vrot.lane.b32.xlu0 %v919, 96
        %v921 = vpop.permute.xlu0 %920
        %v923 = vsel %vm806, %v779, 0
        %v926 = vsel %vm806, %v921, 0
        %928 = vmatpush.bf16.xpose.msra.mxu0 0
        %929 = vmatpush.bf16.xpose.msra.mxu0 0
        %930 = vmatpush.bf16.xpose.msra.mxu0 0
        %931 = vmatpush.bf16.xpose.msra.mxu0 0
        %932 = vmatpush.bf16.xpose.msra.mxu0 0
        %933 = vmatpush.bf16.xpose.msra.mxu0 0
        %934 = vmatpush.bf16.xpose.msra.mxu0 0
        %935 = vmatpush.bf16.xpose.msra.mxu0 %v926
        %936 = vmatmul.bf16.gmra.mxu0 %v923
        %v937 = vpop.f32.mrf.mxu0
        %v938 = vadd.f32 0.0, %v937
        %v939 = vpop.f32.mrf.mxu0
        %940 = vdwg.mxu0
        %v941 = vunpack.c.l.b16 %v795
        %v942 = vpack.c.b16 %v941, %v941
        %943 = vrot.lane.b32.xlu0 %v942, 96
        %v944 = vpop.permute.xlu0 %943
        %v946 = vsel %vm806, %v781, 0
        %v949 = vsel %vm806, %v944, 0
        %951 = vmatpush.bf16.xpose.msra.mxu0 0
        %952 = vmatpush.bf16.xpose.msra.mxu0 0
        %953 = vmatpush.bf16.xpose.msra.mxu0 0
        %954 = vmatpush.bf16.xpose.msra.mxu0 0
        %955 = vmatpush.bf16.xpose.msra.mxu0 0
        %956 = vmatpush.bf16.xpose.msra.mxu0 0
        %957 = vmatpush.bf16.xpose.msra.mxu0 0
        %958 = vmatpush.bf16.xpose.msra.mxu0 %v949
        %959 = vmatmul.bf16.gmra.mxu0 %v946
        %v960 = vpop.f32.mrf.mxu0
        %v961 = vadd.f32 0.0, %v960
        %v962 = vpop.f32.mrf.mxu0
        %963 = vdwg.mxu0
        %v964 = vunpack.c.l.b16 %v797
        %v965 = vpack.c.b16 %v964, %v964
        %966 = vrot.lane.b32.xlu0 %v965, 96
        %v967 = vpop.permute.xlu0 %966
        %v969 = vsel %vm806, %v783, 0
        %v972 = vsel %vm806, %v967, 0
        %974 = vmatpush.bf16.xpose.msra.mxu0 0
        %975 = vmatpush.bf16.xpose.msra.mxu0 0
        %976 = vmatpush.bf16.xpose.msra.mxu0 0
        %977 = vmatpush.bf16.xpose.msra.mxu0 0
        %978 = vmatpush.bf16.xpose.msra.mxu0 0
        %979 = vmatpush.bf16.xpose.msra.mxu0 0
        %980 = vmatpush.bf16.xpose.msra.mxu0 0
        %981 = vmatpush.bf16.xpose.msra.mxu0 %v972
        %982 = vmatmul.bf16.gmra.mxu0 %v969
        %v983 = vpop.f32.mrf.mxu0
        %v984 = vadd.f32 0.0, %v983
        %v985 = vpop.f32.mrf.mxu0
        %986 = vdwg.mxu0
        %vm987 = vcmp.le.s32.totalorder %v801, %v799
        %v988 = vsel %vm987, 1, 0
        %vm989 = vcmp.eq.s32.totalorder %v988, 1
        %v990 = vsel %vm989, %v823, -1e+30
        %v991 = vsel %vm989, %v846, -1e+30
        %v992 = vsel %vm989, %v869, -1e+30
        %v993 = vsel %vm989, %v892, -1e+30
        %v994 = vsel %vm989, %v915, -1e+30
        %v995 = vsel %vm989, %v938, -1e+30
        %v996 = vsel %vm989, %v961, -1e+30
        %v997 = vsel %vm989, %v984, -1e+30
        %v998 = vsel %vm806, %v990, -inf
        %999 = vmax.xlane.f32.xlu0 %v998
        %v1000 = vpop.xlane.xlu0 %999
        %v1001 = vsel %vm806, %v991, -inf
        %1002 = vmax.xlane.f32.xlu0 %v1001
        %v1003 = vpop.xlane.xlu0 %1002
        %v1004 = vsel %vm806, %v992, -inf
        %1005 = vmax.xlane.f32.xlu0 %v1004
        %v1006 = vpop.xlane.xlu0 %1005
        %v1007 = vsel %vm806, %v993, -inf
        %1008 = vmax.xlane.f32.xlu0 %v1007
        %v1009 = vpop.xlane.xlu0 %1008
        %v1010 = vsel %vm806, %v994, -inf
        %1011 = vmax.xlane.f32.xlu0 %v1010
        %v1012 = vpop.xlane.xlu0 %1011
        %v1013 = vsel %vm806, %v995, -inf
        %1014 = vmax.xlane.f32.xlu0 %v1013
        %v1015 = vpop.xlane.xlu0 %1014
        %v1016 = vsel %vm806, %v996, -inf
        %1017 = vmax.xlane.f32.xlu0 %v1016
        %v1018 = vpop.xlane.xlu0 %1017
        %v1019 = vsel %vm806, %v997, -inf
        %1020 = vmax.xlane.f32.xlu0 %v1019
        %v1021 = vpop.xlane.xlu0 %1020
        %v1022 = vmax.f32 %v1000, -1e+30
        %v1023 = vmax.f32 %v1003, -1e+30
        %v1024 = vmax.f32 %v1006, -1e+30
        %v1025 = vmax.f32 %v1009, -1e+30
        %v1026 = vmax.f32 %v1012, -1e+30
        %v1027 = vmax.f32 %v1015, -1e+30
        %v1028 = vmax.f32 %v1018, -1e+30
        %v1029 = vmax.f32 %v1021, -1e+30
        %v1030 = vsub.f32 -1e+30, %v1022
        %v1031 = vsub.f32 -1e+30, %v1023
        %v1032 = vsub.f32 -1e+30, %v1024
        %v1033 = vsub.f32 -1e+30, %v1025
        %v1034 = vsub.f32 -1e+30, %v1026
        %v1035 = vsub.f32 -1e+30, %v1027
        %v1036 = vsub.f32 -1e+30, %v1028
        %v1037 = vsub.f32 -1e+30, %v1029
        %v1038 = vmul.f32 %v1030, 1.442695
        %v1039 = vpow.pop %v1038
        %v1040 = vmul.f32 %v1031, 1.442695
        %v1041 = vpow.pop %v1040
        %v1042 = vmul.f32 %v1032, 1.442695
        %v1043 = vpow.pop %v1042
        %v1044 = vmul.f32 %v1033, 1.442695
        %v1045 = vpow.pop %v1044
        %v1046 = vmul.f32 %v1034, 1.442695
        %v1047 = vpow.pop %v1046
        %v1048 = vmul.f32 %v1035, 1.442695
        %v1049 = vpow.pop %v1048
        %v1050 = vmul.f32 %v1036, 1.442695
        %v1051 = vpow.pop %v1050
        %v1052 = vmul.f32 %v1037, 1.442695
        %v1053 = vpow.pop %v1052
        %v1054 = vsub.f32 %v990, %v1022
        %v1055 = vsub.f32 %v991, %v1023
        %v1056 = vsub.f32 %v992, %v1024
        %v1057 = vsub.f32 %v993, %v1025
        %v1058 = vsub.f32 %v994, %v1026
        %v1059 = vsub.f32 %v995, %v1027
        %v1060 = vsub.f32 %v996, %v1028
        %v1061 = vsub.f32 %v997, %v1029
        %v1062 = vmul.f32 %v1054, 1.442695
        %v1063 = vpow.pop %v1062
        %v1064 = vmul.f32 %v1055, 1.442695
        %v1065 = vpow.pop %v1064
        %v1066 = vmul.f32 %v1056, 1.442695
        %v1067 = vpow.pop %v1066
        %v1068 = vmul.f32 %v1057, 1.442695
        %v1069 = vpow.pop %v1068
        %v1070 = vmul.f32 %v1058, 1.442695
        %v1071 = vpow.pop %v1070
        %v1072 = vmul.f32 %v1059, 1.442695
        %v1073 = vpow.pop %v1072
        %v1074 = vmul.f32 %v1060, 1.442695
        %v1075 = vpow.pop %v1074
        %v1076 = vmul.f32 %v1061, 1.442695
        %v1077 = vpow.pop %v1076
        %v1078 = vmul.f32 %v1039, 0.0
        %v1079 = vmul.f32 %v1041, 0.0
        %v1080 = vmul.f32 %v1043, 0.0
        %v1081 = vmul.f32 %v1045, 0.0
        %v1082 = vmul.f32 %v1047, 0.0
        %v1083 = vmul.f32 %v1049, 0.0
        %v1084 = vmul.f32 %v1051, 0.0
        %v1085 = vmul.f32 %v1053, 0.0
        %v1086 = vsel %vm806, %v1063, 0.0
        %1087 = vadd.xlane.f32.xlu0 %v1086
        %v1088 = vpop.xlane.xlu0 %1087
        %v1089 = vsel %vm806, %v1065, 0.0
        %1090 = vadd.xlane.f32.xlu0 %v1089
        %v1091 = vpop.xlane.xlu0 %1090
        %v1092 = vsel %vm806, %v1067, 0.0
        %1093 = vadd.xlane.f32.xlu0 %v1092
        %v1094 = vpop.xlane.xlu0 %1093
        %v1095 = vsel %vm806, %v1069, 0.0
        %1096 = vadd.xlane.f32.xlu0 %v1095
        %v1097 = vpop.xlane.xlu0 %1096
        %v1098 = vsel %vm806, %v1071, 0.0
        %1099 = vadd.xlane.f32.xlu0 %v1098
        %v1100 = vpop.xlane.xlu0 %1099
        %v1101 = vsel %vm806, %v1073, 0.0
        %1102 = vadd.xlane.f32.xlu0 %v1101
        %v1103 = vpop.xlane.xlu0 %1102
        %v1104 = vsel %vm806, %v1075, 0.0
        %1105 = vadd.xlane.f32.xlu0 %v1104
        %v1106 = vpop.xlane.xlu0 %1105
        %v1107 = vsel %vm806, %v1077, 0.0
        %1108 = vadd.xlane.f32.xlu0 %v1107
        %v1109 = vpop.xlane.xlu0 %1108
        %v1110 = vadd.f32 %v1078, %v1088
        %v1111 = vadd.f32 %v1079, %v1091
        %v1112 = vadd.f32 %v1080, %v1094
        %v1113 = vadd.f32 %v1081, %v1097
        %v1114 = vadd.f32 %v1082, %v1100
        %v1115 = vadd.f32 %v1083, %v1103
        %v1116 = vadd.f32 %v1084, %v1106
        %v1117 = vadd.f32 %v1085, %v1109
        %v1118 = vpack.c.bf16 %v1063, %v1063
        %v1119 = vpack.c.bf16 %v1065, %v1065
        %v1120 = vpack.c.bf16 %v1067, %v1067
        %v1121 = vpack.c.bf16 %v1069, %v1069
        %v1122 = vpack.c.bf16 %v1071, %v1071
        %v1123 = vpack.c.bf16 %v1073, %v1073
        %v1124 = vpack.c.bf16 %v1075, %v1075
        %v1125 = vpack.c.bf16 %v1077, %v1077
        %1126 = vrot.lane.b32.xlu0 %v803, 64
        %v1127 = vpop.permute.xlu0 %1126
        %v1129 = vsel %vm806, %v1118, 0
        %vm1131 = vcmask 1043456
        %v1133 = vsel %vm1131, %v1127, 0
        %1135 = vmatpush.bf16.msra.mxu0 0
        %1136 = vmatpush.bf16.msra.mxu0 0
        %1137 = vmatpush.bf16.msra.mxu0 0
        %1138 = vmatpush.bf16.msra.mxu0 0
        %1139 = vmatpush.bf16.msra.mxu0 0
        %1140 = vmatpush.bf16.msra.mxu0 0
        %1141 = vmatpush.bf16.msra.mxu0 0
        %1142 = vmatpush.bf16.msra.mxu0 %v1133
        %1143 = vmatmul.bf16.gmra.mxu0 %v1129
        %v1144 = vpop.f32.mrf.mxu0
        %v1145 = vadd.f32 0.0, %v1144
        %v1146 = vpop.f32.mrf.mxu0
        %1147 = vdwg.mxu0
        %1148 = vrot.lane.b32.xlu0 %v827, 64
        %v1149 = vpop.permute.xlu0 %1148
        %v1151 = vsel %vm806, %v1119, 0
        %v1154 = vsel %vm1131, %v1149, 0
        %1156 = vmatpush.bf16.msra.mxu0 0
        %1157 = vmatpush.bf16.msra.mxu0 0
        %1158 = vmatpush.bf16.msra.mxu0 0
        %1159 = vmatpush.bf16.msra.mxu0 0
        %1160 = vmatpush.bf16.msra.mxu0 0
        %1161 = vmatpush.bf16.msra.mxu0 0
        %1162 = vmatpush.bf16.msra.mxu0 0
        %1163 = vmatpush.bf16.msra.mxu0 %v1154
        %1164 = vmatmul.bf16.gmra.mxu0 %v1151
        %v1165 = vpop.f32.mrf.mxu0
        %v1166 = vadd.f32 0.0, %v1165
        %v1167 = vpop.f32.mrf.mxu0
        %1168 = vdwg.mxu0
        %1169 = vrot.lane.b32.xlu0 %v850, 64
        %v1170 = vpop.permute.xlu0 %1169
        %v1172 = vsel %vm806, %v1120, 0
        %v1175 = vsel %vm1131, %v1170, 0
        %1177 = vmatpush.bf16.msra.mxu0 0
        %1178 = vmatpush.bf16.msra.mxu0 0
        %1179 = vmatpush.bf16.msra.mxu0 0
        %1180 = vmatpush.bf16.msra.mxu0 0
        %1181 = vmatpush.bf16.msra.mxu0 0
        %1182 = vmatpush.bf16.msra.mxu0 0
        %1183 = vmatpush.bf16.msra.mxu0 0
        %1184 = vmatpush.bf16.msra.mxu0 %v1175
        %1185 = vmatmul.bf16.gmra.mxu0 %v1172
        %v1186 = vpop.f32.mrf.mxu0
        %v1187 = vadd.f32 0.0, %v1186
        %v1188 = vpop.f32.mrf.mxu0
        %1189 = vdwg.mxu0
        %1190 = vrot.lane.b32.xlu0 %v873, 64
        %v1191 = vpop.permute.xlu0 %1190
        %v1193 = vsel %vm806, %v1121, 0
        %v1196 = vsel %vm1131, %v1191, 0
        %1198 = vmatpush.bf16.msra.mxu0 0
        %1199 = vmatpush.bf16.msra.mxu0 0
        %1200 = vmatpush.bf16.msra.mxu0 0
        %1201 = vmatpush.bf16.msra.mxu0 0
        %1202 = vmatpush.bf16.msra.mxu0 0
        %1203 = vmatpush.bf16.msra.mxu0 0
        %1204 = vmatpush.bf16.msra.mxu0 0
        %1205 = vmatpush.bf16.msra.mxu0 %v1196
        %1206 = vmatmul.bf16.gmra.mxu0 %v1193
        %v1207 = vpop.f32.mrf.mxu0
        %v1208 = vadd.f32 0.0, %v1207
        %v1209 = vpop.f32.mrf.mxu0
        %1210 = vdwg.mxu0
        %1211 = vrot.lane.b32.xlu0 %v896, 64
        %v1212 = vpop.permute.xlu0 %1211
        %v1214 = vsel %vm806, %v1122, 0
        %v1217 = vsel %vm1131, %v1212, 0
        %1219 = vmatpush.bf16.msra.mxu0 0
        %1220 = vmatpush.bf16.msra.mxu0 0
        %1221 = vmatpush.bf16.msra.mxu0 0
        %1222 = vmatpush.bf16.msra.mxu0 0
        %1223 = vmatpush.bf16.msra.mxu0 0
        %1224 = vmatpush.bf16.msra.mxu0 0
        %1225 = vmatpush.bf16.msra.mxu0 0
        %1226 = vmatpush.bf16.msra.mxu0 %v1217
        %1227 = vmatmul.bf16.gmra.mxu0 %v1214
        %v1228 = vpop.f32.mrf.mxu0
        %v1229 = vadd.f32 0.0, %v1228
        %v1230 = vpop.f32.mrf.mxu0
        %1231 = vdwg.mxu0
        %1232 = vrot.lane.b32.xlu0 %v919, 64
        %v1233 = vpop.permute.xlu0 %1232
        %v1235 = vsel %vm806, %v1123, 0
        %v1238 = vsel %vm1131, %v1233, 0
        %1240 = vmatpush.bf16.msra.mxu0 0
        %1241 = vmatpush.bf16.msra.mxu0 0
        %1242 = vmatpush.bf16.msra.mxu0 0
        %1243 = vmatpush.bf16.msra.mxu0 0
        %1244 = vmatpush.bf16.msra.mxu0 0
        %1245 = vmatpush.bf16.msra.mxu0 0
        %1246 = vmatpush.bf16.msra.mxu0 0
        %1247 = vmatpush.bf16.msra.mxu0 %v1238
        %1248 = vmatmul.bf16.gmra.mxu0 %v1235
        %v1249 = vpop.f32.mrf.mxu0
        %v1250 = vadd.f32 0.0, %v1249
        %v1251 = vpop.f32.mrf.mxu0
        %1252 = vdwg.mxu0
        %1253 = vrot.lane.b32.xlu0 %v942, 64
        %v1254 = vpop.permute.xlu0 %1253
        %v1256 = vsel %vm806, %v1124, 0
        %v1259 = vsel %vm1131, %v1254, 0
        %1261 = vmatpush.bf16.msra.mxu0 0
        %1262 = vmatpush.bf16.msra.mxu0 0
        %1263 = vmatpush.bf16.msra.mxu0 0
        %1264 = vmatpush.bf16.msra.mxu0 0
        %1265 = vmatpush.bf16.msra.mxu0 0
        %1266 = vmatpush.bf16.msra.mxu0 0
        %1267 = vmatpush.bf16.msra.mxu0 0
        %1268 = vmatpush.bf16.msra.mxu0 %v1259
        %1269 = vmatmul.bf16.gmra.mxu0 %v1256
        %v1270 = vpop.f32.mrf.mxu0
        %v1271 = vadd.f32 0.0, %v1270
        %v1272 = vpop.f32.mrf.mxu0
        %1273 = vdwg.mxu0
        %1274 = vrot.lane.b32.xlu0 %v965, 64
        %v1275 = vpop.permute.xlu0 %1274
        %v1277 = vsel %vm806, %v1125, 0
        %v1280 = vsel %vm1131, %v1275, 0
        %1282 = vmatpush.bf16.msra.mxu0 0
        %1283 = vmatpush.bf16.msra.mxu0 0
        %1284 = vmatpush.bf16.msra.mxu0 0
        %1285 = vmatpush.bf16.msra.mxu0 0
        %1286 = vmatpush.bf16.msra.mxu0 0
        %1287 = vmatpush.bf16.msra.mxu0 0
        %1288 = vmatpush.bf16.msra.mxu0 0
        %1289 = vmatpush.bf16.msra.mxu0 %v1280
        %1290 = vmatmul.bf16.gmra.mxu0 %v1277
        %v1291 = vpop.f32.mrf.mxu0
        %v1292 = vadd.f32 0.0, %v1291
        %v1293 = vpop.f32.mrf.mxu0
        %1294 = vdwg.mxu0
        %v1295 = vadd.f32 %v1078, %v1145
        %v1296 = vadd.f32 %v1079, %v1166
        %v1297 = vadd.f32 %v1080, %v1187
        %v1298 = vadd.f32 %v1081, %v1208
        %v1299 = vadd.f32 %v1082, %v1229
        %v1300 = vadd.f32 %v1083, %v1250
        %v1301 = vadd.f32 %v1084, %v1271
        %v1302 = vadd.f32 %v1085, %v1292
        %v1303 = vrcp.pop %v1110
        %v1304 = vrcp.pop %v1111
        %v1305 = vrcp.pop %v1112
        %v1306 = vrcp.pop %v1113
        %v1307 = vrcp.pop %v1114
        %v1308 = vrcp.pop %v1115
        %v1309 = vrcp.pop %v1116
        %v1310 = vrcp.pop %v1117
        %v1311 = vmul.f32 %v1295, %v1303
        %v1312 = vmul.f32 %v1296, %v1304
        %v1313 = vmul.f32 %v1297, %v1305
        %v1314 = vmul.f32 %v1298, %v1306
        %v1315 = vmul.f32 %v1299, %v1307
        %v1316 = vmul.f32 %v1300, %v1308
        %v1317 = vmul.f32 %v1301, %v1309
        %v1318 = vmul.f32 %v1302, %v1310
        %1321 = vrot.lane.b32.xlu0 %v1313, 8
        %v1322 = vpop.permute.xlu0 %1321
        %1323 = vrot.lane.b32.xlu0 %v1314, 8
        %v1324 = vpop.permute.xlu0 %1323
        %1329 = vrot.lane.b32.xlu0 %v1315, 16
        %v1330 = vpop.permute.xlu0 %1329
        %1331 = vrot.lane.b32.xlu0 %v1316, 16
        %v1332 = vpop.permute.xlu0 %1331
        %1337 = vrot.lane.b32.xlu0 %v1317, 24
        %v1338 = vpop.permute.xlu0 %1337
        %1339 = vrot.lane.b32.xlu0 %v1318, 24
        %v1340 = vpop.permute.xlu0 %1339
        %v1343 = vsel %vm806, %v1311, %v1322
        %v1344 = vsel %vm806, %v1312, %v1324
        %vm1345 = vcmask 130048
        %v1346 = vsel %vm1345, %v1343, %v1330
        %v1347 = vsel %vm1345, %v1344, %v1332
        %vm1348 = vcmask 195584
        %v1349 = vsel %vm1348, %v1346, %v1338
        %v1350 = vsel %vm1348, %v1347, %v1340
        %v1351 = vpack.c.bf16 %v1350, %v1349
        %v1352 = vld [vmem:[%s625] sm:$0xf]
        %v1353 = vld [vmem:[%s625 + $0x4] sm:$0xf]
        %v1354 = vld [vmem:[%s625 + $0x8] sm:$0xf]
        %v1355 = vld [vmem:[%s625 + $0xc] sm:$0xf]
        %v1356 = vld [vmem:[%s628] sm:$0x1]
        %v1358 = vperm.slane %v1356, 0
        %v1364 = vunpack.c.l.b16 %v1352
        %v1365 = vunpack.c.l.b16 %v1353
        %v1366 = vunpack.c.l.b16 %v1354
        %v1367 = vunpack.c.l.b16 %v1355
        %v1368 = vpack.c.b16 %v1365, %v1364
        %v1369 = vpack.c.b16 %v1367, %v1366
        %v1373 = vsel %vm666, %v1351, 0
        %1375 = vmatpush.bf16.msra.mxu0 0
        %1376 = vmatpush.bf16.msra.mxu0 0
        %1377 = vmatpush.bf16.msra.mxu0 0
        %1378 = vmatpush.bf16.msra.mxu0 0
        %1379 = vmatpush.bf16.msra.mxu0 0
        %1380 = vmatpush.bf16.msra.mxu0 0
        %1381 = vmatpush.bf16.msra.mxu0 %v1369
        %1382 = vmatpush.bf16.msra.mxu0 %v1368
        %1383 = vmatmul.bf16.gmra.mxu0 %v1373
        %v1384 = vpop.f32.mrf.mxu0
        %v1385 = vadd.f32 %v1358, %v1384
        %v1386 = vpop.f32.mrf.mxu0
        %v1387 = vadd.f32 %v1358, %v1386
        %1388 = vdwg.mxu0
        %v1389 = vadd.f32 %v662, %v1385
        %v1390 = vadd.f32 %v663, %v1387
        %v1391 = vld [vmem:[%s631] sm:$0x1]
        %v1392 = vld [vmem:[%s634] sm:$0x1]
        %v1393 = vsel %vm666, %v1389, 0.0
        %1394 = vadd.xlane.f32.xlu0 %v1393
        %v1395 = vpop.xlane.xlu0 %1394
        %v1396 = vsel %vm666, %v1390, 0.0
        %1397 = vadd.xlane.f32.xlu0 %v1396
        %v1398 = vpop.xlane.xlu0 %1397
        %v1399 = vmul.f32 %v1395, %v679
        %v1400 = vmul.f32 %v1398, %v679
        %v1401 = vsub.f32 %v1389, %v1399
        %v1402 = vsub.f32 %v1390, %v1400
        %v1403 = vmul.f32 %v1401, %v1401
        %v1404 = vmul.f32 %v1402, %v1402
        %v1405 = vsel %vm666, %v1403, 0.0
        %1406 = vadd.xlane.f32.xlu0 %v1405
        %v1407 = vpop.xlane.xlu0 %1406
        %v1408 = vsel %vm666, %v1404, 0.0
        %1409 = vadd.xlane.f32.xlu0 %v1408
        %v1410 = vpop.xlane.xlu0 %1409
        %v1411 = vmul.f32 %v1407, %v679
        %v1412 = vmul.f32 %v1410, %v679
        %v1413 = vadd.f32 %v1411, 1e-05
        %v1414 = vadd.f32 %v1412, 1e-05
        %v1415 = vrsqrt.pop %v1413
        %v1416 = vmul.f32 %v1415, %v1413
        %v1417 = vmul.f32 %v1416, %v1415
        %v1418 = vmul.f32 0.5, %v1417
        %v1419 = vsub.f32 1.5, %v1418
        %v1420 = vmul.f32 %v1415, %v1419
        %vm1421 = vweird.f32 %v1413
        %vm1422 = vweird.f32 %v1415
        %vm1423 = vmor %vm1421, %vm1422
        %v1424 = vsel %vm1423, %v1415, %v1420
        %v1425 = vrsqrt.pop %v1414
        %v1426 = vmul.f32 %v1425, %v1414
        %v1427 = vmul.f32 %v1426, %v1425
        %v1428 = vmul.f32 0.5, %v1427
        %v1429 = vsub.f32 1.5, %v1428
        %v1430 = vmul.f32 %v1425, %v1429
        %vm1431 = vweird.f32 %v1414
        %vm1432 = vweird.f32 %v1425
        %vm1433 = vmor %vm1431, %vm1432
        %v1434 = vsel %vm1433, %v1425, %v1430
        %v1435 = vmul.f32 %v1401, %v1424
        %v1436 = vmul.f32 %v1402, %v1434
        %v1438 = vperm.slane %v1391, 0
        %v1440 = vmul.f32 %v1435, %v1438
        %v1441 = vmul.f32 %v1436, %v1438
        %v1443 = vperm.slane %v1392, 0
        %v1445 = vadd.f32 %v1440, %v1443
        %v1446 = vadd.f32 %v1441, %v1443
        %v1447 = vpack.c.bf16 %v1446, %v1445
        %v1448 = vld [vmem:[%s639] sm:$0xf]
        %v1449 = vld [vmem:[%s639 + $0x4] sm:$0xf]
        %v1450 = vld [vmem:[%s639 + $0x8] sm:$0xf]
        %v1451 = vld [vmem:[%s639 + $0xc] sm:$0xf]
        %v1452 = vld [vmem:[%s642] sm:$0x1]
        %v1454 = vperm.slane %v1452, 0
        %v1460 = vunpack.c.l.b16 %v1448
        %v1461 = vunpack.c.l.b16 %v1449
        %v1462 = vunpack.c.l.b16 %v1450
        %v1463 = vunpack.c.l.b16 %v1451
        %v1464 = vpack.c.b16 %v1461, %v1460
        %v1465 = vpack.c.b16 %v1463, %v1462
        %v1469 = vsel %vm666, %v1447, 0
        %1471 = vmatpush.bf16.msra.mxu0 0
        %1472 = vmatpush.bf16.msra.mxu0 0
        %1473 = vmatpush.bf16.msra.mxu0 0
        %1474 = vmatpush.bf16.msra.mxu0 0
        %1475 = vmatpush.bf16.msra.mxu0 0
        %1476 = vmatpush.bf16.msra.mxu0 0
        %1477 = vmatpush.bf16.msra.mxu0 %v1465
        %1478 = vmatpush.bf16.msra.mxu0 %v1464
        %1479 = vmatmul.bf16.gmra.mxu0 %v1469
        %v1480 = vpop.f32.mrf.mxu0
        %v1481 = vadd.f32 %v1454, %v1480
        %v1482 = vpop.f32.mrf.mxu0
        %v1483 = vadd.f32 %v1454, %v1482
        %1484 = vdwg.mxu0
        %v1485 = vmax.f32 %v1481, 0.0
        %v1486 = vmax.f32 %v1483, 0.0
        %v1487 = vpack.c.bf16 %v1486, %v1485
        %v1488 = vld [vmem:[%s647] sm:$0xf]
        %v1489 = vld [vmem:[%s647 + $0x4] sm:$0xf]
        %v1490 = vld [vmem:[%s647 + $0x8] sm:$0xf]
        %v1491 = vld [vmem:[%s647 + $0xc] sm:$0xf]
        %v1492 = vld [vmem:[%s647 + $0x10] sm:$0xf]
        %v1493 = vld [vmem:[%s647 + $0x14] sm:$0xf]
        %v1494 = vld [vmem:[%s647 + $0x18] sm:$0xf]
        %v1495 = vld [vmem:[%s647 + $0x1c] sm:$0xf]
        %v1496 = vld [vmem:[%s647 + $0x20] sm:$0xf]
        %v1497 = vld [vmem:[%s647 + $0x24] sm:$0xf]
        %v1498 = vld [vmem:[%s647 + $0x28] sm:$0xf]
        %v1499 = vld [vmem:[%s647 + $0x2c] sm:$0xf]
        %v1500 = vld [vmem:[%s647 + $0x30] sm:$0xf]
        %v1501 = vld [vmem:[%s647 + $0x34] sm:$0xf]
        %v1502 = vld [vmem:[%s647 + $0x38] sm:$0xf]
        %v1503 = vld [vmem:[%s647 + $0x3c] sm:$0xf]
        %v1504 = vld [vmem:[%s650] sm:$0x1]
        %v1506 = vperm.slane %v1504, 0
        %v1524 = vunpack.c.l.b16 %v1488
        %v1525 = vunpack.c.l.b16 %v1489
        %v1526 = vunpack.c.l.b16 %v1490
        %v1527 = vunpack.c.l.b16 %v1491
        %v1528 = vunpack.c.l.b16 %v1492
        %v1529 = vunpack.c.l.b16 %v1493
        %v1530 = vunpack.c.l.b16 %v1494
        %v1531 = vunpack.c.l.b16 %v1495
        %v1532 = vunpack.c.l.b16 %v1496
        %v1533 = vunpack.c.l.b16 %v1497
        %v1534 = vunpack.c.l.b16 %v1498
        %v1535 = vunpack.c.l.b16 %v1499
        %v1536 = vunpack.c.l.b16 %v1500
        %v1537 = vunpack.c.l.b16 %v1501
        %v1538 = vunpack.c.l.b16 %v1502
        %v1539 = vunpack.c.l.b16 %v1503
        %v1540 = vpack.c.b16 %v1525, %v1524
        %v1541 = vpack.c.b16 %v1527, %v1526
        %v1542 = vpack.c.b16 %v1529, %v1528
        %v1543 = vpack.c.b16 %v1531, %v1530
        %v1544 = vpack.c.b16 %v1533, %v1532
        %v1545 = vpack.c.b16 %v1535, %v1534
        %v1546 = vpack.c.b16 %v1537, %v1536
        %v1547 = vpack.c.b16 %v1539, %v1538
        %1556 = vmatpush.bf16.msra.mxu0 %v1547
        %1557 = vmatpush.bf16.msra.mxu0 %v1546
        %1558 = vmatpush.bf16.msra.mxu0 %v1545
        %1559 = vmatpush.bf16.msra.mxu0 %v1544
        %1560 = vmatpush.bf16.msra.mxu0 %v1543
        %1561 = vmatpush.bf16.msra.mxu0 %v1542
        %1562 = vmatpush.bf16.msra.mxu0 %v1541
        %1563 = vmatpush.bf16.msra.mxu0 %v1540
        %1564 = vmatmul.bf16.gmra.mxu0 %v1487
        %v1565 = vpop.f32.mrf.mxu0
        %v1566 = vadd.f32 %v1506, %v1565
        %v1567 = vpop.f32.mrf.mxu0
        %v1568 = vadd.f32 %v1506, %v1567
        %1569 = vdwg.mxu0
        %v1570 = vadd.f32 %v1389, %v1566
        %v1571 = vadd.f32 %v1390, %v1568
        %1572 = vst.msk [vmem:[#allocation2] sm:$0xff] %vm666, %v1570
        %1573 = vst.msk [vmem:[#allocation2 + $0x8] sm:$0xff] %vm666, %v1571
        %p1574 = scmp.eq.s32.totalorder %s31, 1
        // Predicated region
        $region81: #{tpu_custom_call.1} parent=75 // pred_check
          %p1575 = pneg %p1574
        $region82: #{tpu_custom_call.1} parent=75 // pred_check_branch
          %1577 = sbr.rel (%p1575) target = $region84
        $region83: #{tpu_custom_call.1} parent=75 // pred_region
          %v1578 = vld [vmem:[%s12] sm:$0x1]
          %v1579 = vld [vmem:[%s13] sm:$0x1]
          %v1580 = vsel %vm666, %v1570, 0.0
          %1581 = vadd.xlane.f32.xlu0 %v1580
          %v1582 = vpop.xlane.xlu0 %1581
          %v1583 = vsel %vm666, %v1571, 0.0
          %1584 = vadd.xlane.f32.xlu0 %v1583
          %v1585 = vpop.xlane.xlu0 %1584
          %v1586 = vmul.f32 %v1582, %v679
          %v1587 = vmul.f32 %v1585, %v679
          %v1588 = vsub.f32 %v1570, %v1586
          %v1589 = vsub.f32 %v1571, %v1587
          %v1590 = vmul.f32 %v1588, %v1588
          %v1591 = vmul.f32 %v1589, %v1589
          %v1592 = vsel %vm666, %v1590, 0.0
          %1593 = vadd.xlane.f32.xlu0 %v1592
          %v1594 = vpop.xlane.xlu0 %1593
          %v1595 = vsel %vm666, %v1591, 0.0
          %1596 = vadd.xlane.f32.xlu0 %v1595
          %v1597 = vpop.xlane.xlu0 %1596
          %v1598 = vmul.f32 %v1594, %v679
          %v1599 = vmul.f32 %v1597, %v679
          %v1600 = vadd.f32 %v1598, 1e-05
          %v1601 = vadd.f32 %v1599, 1e-05
          %v1602 = vrsqrt.pop %v1600
          %v1603 = vmul.f32 %v1602, %v1600
          %v1604 = vmul.f32 %v1603, %v1602
          %v1605 = vmul.f32 0.5, %v1604
          %v1606 = vsub.f32 1.5, %v1605
          %v1607 = vmul.f32 %v1602, %v1606
          %vm1608 = vweird.f32 %v1600
          %vm1609 = vweird.f32 %v1602
          %vm1610 = vmor %vm1608, %vm1609
          %v1611 = vsel %vm1610, %v1602, %v1607
          %v1612 = vrsqrt.pop %v1601
          %v1613 = vmul.f32 %v1612, %v1601
          %v1614 = vmul.f32 %v1613, %v1612
          %v1615 = vmul.f32 0.5, %v1614
          %v1616 = vsub.f32 1.5, %v1615
          %v1617 = vmul.f32 %v1612, %v1616
          %vm1618 = vweird.f32 %v1601
          %vm1619 = vweird.f32 %v1612
          %vm1620 = vmor %vm1618, %vm1619
          %v1621 = vsel %vm1620, %v1612, %v1617
          %v1622 = vmul.f32 %v1588, %v1611
          %v1623 = vmul.f32 %v1589, %v1621
          %v1625 = vperm.slane %v1578, 0
          %v1627 = vmul.f32 %v1622, %v1625
          %v1628 = vmul.f32 %v1623, %v1625
          %v1630 = vperm.slane %v1579, 0
          %v1632 = vadd.f32 %v1627, %v1630
          %v1633 = vadd.f32 %v1628, %v1630
          %v1634 = vpack.c.bf16 %v1632, %v1632
          %v1635 = vpack.c.bf16 %v1633, %v1633
          %vm1636 = vcmask 257024
          %1637 = vst.msk [vmem:[#allocation3] sm:$0xf] %vm1636, %v1634
          %1638 = vst.msk [vmem:[#allocation3 + $0x4] sm:$0xf] %vm1636, %v1635
        $region84: #{tpu_custom_call.1} parent=75 // pred_fallthru
          _
        // Predicated region
        $region85: #{tpu_custom_call.1} parent=75 // pred_check
          %p1639 = pneg %p410
        $region86: #{tpu_custom_call.1} parent=75 // pred_check_branch
          %1641 = sbr.rel (%p1639) target = $region88
        $region87: #{tpu_custom_call.1} parent=75 // pred_region
          %s1642 = smul.u32 2, %s30
          %1644 = vsyncadd [#allocation4], 0
          %s1645 = smul.addr %s1642, 4
          %s1646 = scalar_lea.hbm %s14, %s1645
          %s1647 = sshll.u32 [#allocation3], 4
          %s1648 = int_to_ptr.vmem [resolvable:$true] %s1647
          %s1649 = sshll.u32 %s1646, 4
          %s1650 = int_to_ptr.hbm [resolvable:$true] %s1649
          %1655 = dma.vmem_to_hbm [thread:$0]  %s1648, 128, %s1650, [#allocation4], 64, 64, 4
        $region88: #{tpu_custom_call.1} parent=75 // pred_fallthru
          _
        // Predicated region
        $region89: #{tpu_custom_call.1} parent=75 // pred_check
          %p1656 = pneg %p410
        $region90: #{tpu_custom_call.1} parent=75 // pred_check_branch
          %1658 = sbr.rel (%p1656) target = $region92
        $region91: #{tpu_custom_call.1} parent=75 // pred_region
          %1660 = dma.done [#allocation4], 128
        $region92: #{tpu_custom_call.1} parent=75 // pred_fallthru
          _
      $region76: #{tpu_custom_call.1} parent=5 // pred_fallthru
        _
      %p1661 = scmp.le.s32.totalorder 2, %s21
      // Predicated region
      $region93: #{tpu_custom_call.1} parent=5 // pred_check
        %p1662 = pneg %p1661
      $region94: #{tpu_custom_call.1} parent=5 // pred_check_branch
        %1664 = sbr.rel (%p1662) target = $region96
      $region95: #{tpu_custom_call.1} parent=5 // pred_region
        %s1665 = ssub.s32 %s21, 2
      $region96: #{tpu_custom_call.1} parent=5 // pred_fallthru
        _
    $region6: #{tpu_custom_call.1} parent=1 // loop_footer
      %s25 = sadd.s32 1, %s21
    $region7: #{tpu_custom_call.1} parent=1 // loop_footer_branch
      %20 = sbr.rel target = $region3
    $region8: #{tpu_custom_call.1} parent=1 // loop_exit
      _
    %1666 = vsyncpa [#allocation4], 1
    %s1667 = scalar_lea.sflag [#allocation4], 1
    %1668 = vsyncpa %s1667, 1

</llo_original>
